<compile_context>
chip_gen: v5e
topology: v5e:2x2
jax: 0.10.0
libtpu: 0.0.40
codegen_flags: <defaults>
</compile_context>

<pallas_src>
import functools

import jax
import jax.numpy as jnp
from jax.experimental import pallas as pl
from jax.experimental.pallas import tpu as pltpu


NEG_INF = -1e30  # additive mask sentinel (keep f32; do not lower to fp16)


def _round_up(v, m):
    return ((v + m - 1) // m) * m


# --------------------------------------------------------------------------- #
# Kernel: one GATConv layer, one destination-row tile per grid step.
# --------------------------------------------------------------------------- #
def _gat_layer_kernel(x_src_ref, x_dst_ref, w_ref, wsrc_ref, wdst_ref, bias_ref,
                      adjb_ref, out_ref, *maybe_alpha_ref,
                      heads, f_out, concat, apply_elu, return_alpha,
                      negative_slope=0.2):
    """
    x_src_ref: [N_p, F_in]      all (padded) nodes, source features
    x_dst_ref: [TD,  F_in]      this tile's destination nodes
    w_ref:     [F_in, heads*f_out]   fused projection weights (f_out lane-padded)
    wsrc_ref:  [F_in, heads]    W_h @ att_src_h   (precomputed in wrapper)
    wdst_ref:  [F_in, heads]    W_h @ att_dst_h
    bias_ref:  [1, out_dim]
    adjb_ref:  [TD, N_p]        additive mask: 0 on edges (incl self-loops), -1e30 else
    out_ref:   [TD, out_dim]
    alpha_ref: [heads, TD, N_p] (only when return_alpha)
    """
    alpha_ref = maybe_alpha_ref[0] if return_alpha else None

    x_src = x_src_ref[...]                                  # [N_p, F_in]
    x_dst = x_dst_ref[...]                                  # [TD,  F_in]
    n_p = x_src.shape[0]

    # Fused projection: one wide MXU matmul for all heads.
    feat = jnp.dot(x_src, w_ref[...], preferred_element_type=jnp.float32)   # [N_p, H*F]
    # Attention score projections (no cross-lane reductions needed later).
    a_src_all = jnp.dot(x_src, wsrc_ref[...], preferred_element_type=jnp.float32)  # [N_p, H]
    a_dst_all = jnp.dot(x_dst, wdst_ref[...], preferred_element_type=jnp.float32)  # [TD, H]

    adjb = adjb_ref[...]                                    # [TD, N_p], hoisted out of head loop
    ns = jnp.float32(negative_slope)

    head_outs = []
    for h in range(heads):                                  # heads is small & static
        a_dst = a_dst_all[:, h:h + 1]                       # [TD, 1]
        a_src = jnp.reshape(a_src_all[:, h:h + 1], (1, n_p))  # [1, N_p]

        # e[i, j] = leaky_relu(a_dst[i] + a_src[j]) + additive mask   (edge j -> i)
        e = a_dst + a_src
        e = jnp.where(e > 0, e, ns * e)
        e = e + adjb

        # softmax over incoming edges (src axis); masked entries underflow to 0.
        m = jnp.max(e, axis=-1, keepdims=True)
        p = jnp.exp(e - m)
        denom = jnp.sum(p, axis=-1, keepdims=True)
        alpha = p * pl.reciprocal(denom, approx=True)       # EUP reciprocal
        if return_alpha:
            alpha_ref[h] = alpha

        # aggregate: out_h[i] = sum_j alpha[i, j] * feat_h[j]   (128-aligned slice)
        feat_h = feat[:, h * f_out:(h + 1) * f_out]
        head_outs.append(jnp.dot(alpha, feat_h, preferred_element_type=jnp.float32))

    if concat:
        out = head_outs[0] if heads == 1 else jnp.concatenate(head_outs, axis=-1)
    else:
        out = head_outs[0]
        for t in head_outs[1:]:
            out = out + t
        out = out * (1.0 / heads)

    out = out + bias_ref[...]
    if apply_elu:
        out = jnp.where(out > 0, out, jnp.exp(out) - 1.0)   # fused F.elu
    out_ref[...] = out.astype(out_ref.dtype)                # lane-dense (out_dim % 128 == 0)


# --------------------------------------------------------------------------- #
# Wrapper for one GATConv layer (inputs already padded / lane-dense).
# --------------------------------------------------------------------------- #
def gat_conv(x, adjb, w, w_src, w_dst, bias, *, heads, f_out, concat,
             apply_elu, return_alpha, tile):
    n_p, f_in = x.shape
    out_dim = heads * f_out if concat else f_out
    assert n_p % tile == 0

    kernel = functools.partial(
        _gat_layer_kernel, heads=heads, f_out=f_out, concat=concat,
        apply_elu=apply_elu, return_alpha=return_alpha)

    in_specs = [
        pl.BlockSpec((n_p, f_in), lambda i: (0, 0)),            # x (all source nodes)
        pl.BlockSpec((tile, f_in), lambda i: (i, 0)),           # x (dst tile)
        pl.BlockSpec((f_in, heads * f_out), lambda i: (0, 0)),  # W (fused, padded)
        pl.BlockSpec((f_in, heads), lambda i: (0, 0)),          # W @ att_src
        pl.BlockSpec((f_in, heads), lambda i: (0, 0)),          # W @ att_dst
        pl.BlockSpec((1, out_dim), lambda i: (0, 0)),           # bias
        pl.BlockSpec((tile, n_p), lambda i: (i, 0)),            # additive adjacency mask
    ]
    if return_alpha:
        out_shape = (jax.ShapeDtypeStruct((n_p, out_dim), jnp.float32),
                     jax.ShapeDtypeStruct((heads, n_p, n_p), jnp.float32))
        out_specs = (pl.BlockSpec((tile, out_dim), lambda i: (i, 0)),
                     pl.BlockSpec((heads, tile, n_p), lambda i: (0, i, 0)))
    else:
        out_shape = jax.ShapeDtypeStruct((n_p, out_dim), jnp.float32)
        out_specs = pl.BlockSpec((tile, out_dim), lambda i: (i, 0))

    result = pl.pallas_call(
        kernel,
        grid=(n_p // tile,),
        out_shape=out_shape,
        in_specs=in_specs,
        out_specs=out_specs,
        compiler_params=pltpu.CompilerParams(
            dimension_semantics=("parallel",),      # megacore-shardable dst tiles
            vmem_limit_bytes=48 * 1024 * 1024),     # above default scoped VMEM on all gens
    )(x, x, w, w_src, w_dst, bias, adjb)

    if return_alpha:
        return result
    return result, None


# --------------------------------------------------------------------------- #
# Parameters (same layout as before).
# --------------------------------------------------------------------------- #
def init_params(key, in_c, hid_c, out_c, heads):
    ks = jax.random.split(key, 6)

    def glorot(k, shape):
        fan_in, fan_out = shape[-2], shape[-1]
        limit = (6.0 / (fan_in + fan_out)) ** 0.5
        return jax.random.uniform(k, shape, jnp.float32, -limit, limit)

    return dict(
        w1=glorot(ks[0], (in_c, heads * hid_c)),
        att_src1=glorot(ks[1], (heads, hid_c)),
        att_dst1=glorot(ks[2], (heads, hid_c)),
        b1=jnp.zeros((1, heads * hid_c), jnp.float32),
        w2=glorot(ks[3], (heads * hid_c, out_c)),
        att_src2=glorot(ks[4], (1, out_c)),
        att_dst2=glorot(ks[5], (1, out_c)),
        b2=jnp.zeros((1, out_c), jnp.float32),
    )


# --------------------------------------------------------------------------- #
# Full forward of GAT_test2 (eval mode).
# --------------------------------------------------------------------------- #
def gat_test2_forward(params, x, edge_index, *, heads, hid_c, out_c):
    """Returns ((edge_index_with_self_loops, attention_coeffs [E+N, 1]), out [N, out_c])."""
    n, in_c = x.shape
    src, dst = edge_index[0], edge_index[1]

    # ---- padding geometry: dst tiles, lane-dense (multiples of 128) src axis ----
    n_p = _round_up(n, 128)
    if n_p <= 512:
        tile = n_p
    else:
        n_p = _round_up(n, 512)
        tile = 512
    hid_p = _round_up(hid_c, 128)     # per-head hidden dim, lane-padded
    out_p = _round_up(out_c, 128)     # output dim, lane-padded

    # ---- additive adjacency mask adjb[dst, src]: 0 on edges (+ self-loops), -1e30 else ----
    diag = jnp.arange(n)
    adjb = jnp.full((n_p, n_p), NEG_INF, jnp.float32)
    adjb = adjb.at[dst, src].set(0.0)
    adjb = adjb.at[diag, diag].set(0.0)

    # ---- node features, row-padded ----
    x_p = jnp.pad(x, ((0, n_p - n), (0, 0)))                       # [n_p, in_c]

    # ---- conv1 params: pad each head's feature block to hid_p columns ----
    w1 = params['w1'].reshape(in_c, heads, hid_c)
    w1_p = jnp.pad(w1, ((0, 0), (0, 0), (0, hid_p - hid_c))).reshape(in_c, heads * hid_p)
    b1 = params['b1'].reshape(1, heads, hid_c)
    b1_p = jnp.pad(b1, ((0, 0), (0, 0), (0, hid_p - hid_c))).reshape(1, heads * hid_p)
    # Fold attention vectors into tiny projections: wsrc1[:, h] = W1_h @ att_src1[h]
    wsrc1 = jnp.einsum('ihk,hk->ih', w1, params['att_src1'])        # [in_c, heads]
    wdst1 = jnp.einsum('ihk,hk->ih', w1, params['att_dst1'])        # [in_c, heads]

    # F.dropout(p=0.6, training=False) -> identity.
    h1_p, _ = gat_conv(x_p, adjb, w1_p, wsrc1, wdst1, b1_p,
                       heads=heads, f_out=hid_p, concat=True,
                       apply_elu=True, return_alpha=False, tile=tile)
    # h1_p: [n_p, heads*hid_p]; padded columns are exactly 0, padded rows are junk-but-finite.

    # ---- conv2 params: row-pad to match conv1's padded output layout, col-pad to out_p ----
    w2 = params['w2'].reshape(heads, hid_c, out_c)
    w2_p = jnp.pad(w2, ((0, 0), (0, hid_p - hid_c), (0, out_p - out_c)))
    w2_p = w2_p.reshape(heads * hid_p, out_p)
    b2_p = jnp.pad(params['b2'], ((0, 0), (0, out_p - out_c)))      # [1, out_p]
    att_src2_p = jnp.pad(params['att_src2'], ((0, 0), (0, out_p - out_c)))  # [1, out_p]
    att_dst2_p = jnp.pad(params['att_dst2'], ((0, 0), (0, out_p - out_c)))
    wsrc2 = jnp.dot(w2_p, att_src2_p.T)                             # [heads*hid_p, 1]
    wdst2 = jnp.dot(w2_p, att_dst2_p.T)

    # F.dropout -> identity.
    h2_p, alpha = gat_conv(h1_p, adjb, w2_p, wsrc2, wdst2, b2_p,
                           heads=1, f_out=out_p, concat=False,
                           apply_elu=False, return_alpha=True, tile=tile)

    out = h2_p[:n, :out_c]

    # return_attention_weights=True: (edge_index incl. self-loops, alpha per edge)
    # TODO(synk): per-edge alpha gather is done in XLA on the dense [1, n_p, n_p] map
    # (an in-kernel scalar-prefetched gather would avoid the dense write for huge graphs).
    self_loops = jnp.stack([diag, diag]).astype(edge_index.dtype)
    ei_sl = jnp.concatenate([edge_index, self_loops], axis=1)
    alpha_edges = alpha[0, ei_sl[1], ei_sl[0]][:, None]             # [E + N, heads=1]
    return (ei_sl, alpha_edges), out


if __name__ == "__main__":
    key = jax.random.PRNGKey(0)
    k_x, k_p = jax.random.split(key)

    N, IN_C, HID_C, OUT_C, HEADS = 16, 8, 16, 8, 2

    x = jax.random.normal(k_x, (N, IN_C), jnp.float32)

    # Deterministic graph: ring edges + chord edges (no self-loops, no dupes).
    idx = jnp.arange(N, dtype=jnp.int32)
    src = jnp.concatenate([idx, idx])
    dst = jnp.concatenate([(idx + 1) % N, (idx + 3) % N])
    edge_index = jnp.stack([src, dst])                              # [2, 32]

    params = init_params(k_p, IN_C, HID_C, OUT_C, HEADS)

    (ei_sl, alpha_edges), out = gat_test2_forward(
        params, x, edge_index, heads=HEADS, hid_c=HID_C, out_c=OUT_C)

    out = jax.block_until_ready(out)
    alpha_edges = jax.block_until_ready(alpha_edges)
    ei_sl = jax.block_until_ready(ei_sl)

    assert out.shape == (N, OUT_C)
    assert ei_sl.shape == (2, edge_index.shape[1] + N)
    assert alpha_edges.shape == (edge_index.shape[1] + N, 1)
    assert bool(jnp.all(jnp.isfinite(out)))
    assert bool(jnp.all(alpha_edges >= 0.0))
    # Attention coefficients of incoming edges (incl. self-loop) sum to ~1 per node.
    row_sum = jnp.zeros(N).at[ei_sl[1]].add(alpha_edges[:, 0])
    assert bool(jnp.all(jnp.abs(row_sum - 1.0) < 1e-2))

    print("KERNEL_OK")
</pallas_src>

<mosaic_0001>
module attributes {stable_mosaic.version = 11 : i64} {
  func.func @_gat_layer_kernel(%arg0: i32, %arg1: memref<128x8xf32, #tpu.memory_space<vmem>>, %arg2: memref<128x8xf32, #tpu.memory_space<vmem>>, %arg3: memref<8x256xf32, #tpu.memory_space<vmem>>, %arg4: memref<8x2xf32, #tpu.memory_space<vmem>>, %arg5: memref<8x2xf32, #tpu.memory_space<vmem>>, %arg6: memref<1x256xf32, #tpu.memory_space<vmem>>, %arg7: memref<128x128xf32, #tpu.memory_space<vmem>>, %arg8: memref<128x256xf32, #tpu.memory_space<vmem>>) attributes {dimension_semantics = [#tpu.dimension_semantics<parallel>], iteration_bounds = array<i64: 1>, scalar_prefetch = 0 : i64, scratch_operands = 0 : i64, tpu.core_type = #tpu.core_type<tc>, window_params = [{pipeline_mode = #tpu.pipeline_mode<synchronous>, transform_indices = @transform_0, window_bounds = array<i64: 128, 8>}, {transform_indices = @transform_1, window_bounds = array<i64: 128, 8>}, {pipeline_mode = #tpu.pipeline_mode<synchronous>, transform_indices = @transform_2, window_bounds = array<i64: 8, 256>}, {pipeline_mode = #tpu.pipeline_mode<synchronous>, transform_indices = @transform_3, window_bounds = array<i64: 8, 2>}, {pipeline_mode = #tpu.pipeline_mode<synchronous>, transform_indices = @transform_4, window_bounds = array<i64: 8, 2>}, {pipeline_mode = #tpu.pipeline_mode<synchronous>, transform_indices = @transform_5, window_bounds = array<i64: 1, 256>}, {transform_indices = @transform_6, window_bounds = array<i64: 128, 128>}, {transform_indices = @transform_7, window_bounds = array<i64: 128, 256>}]} {
    %c0 = arith.constant 0 : index
    %c0_0 = arith.constant 0 : index
    %0 = vector.load %arg1[%c0, %c0_0] : memref<128x8xf32, #tpu.memory_space<vmem>>, vector<128x8xf32>
    %c0_1 = arith.constant 0 : index
    %c0_2 = arith.constant 0 : index
    %1 = vector.load %arg2[%c0_1, %c0_2] : memref<128x8xf32, #tpu.memory_space<vmem>>, vector<128x8xf32>
    %c0_3 = arith.constant 0 : index
    %c0_4 = arith.constant 0 : index
    %2 = vector.load %arg3[%c0_3, %c0_4] : memref<8x256xf32, #tpu.memory_space<vmem>>, vector<8x256xf32>
    %cst = arith.constant dense<0.000000e+00> : vector<128x256xf32>
    %3 = tpu.matmul %0, %2, %cst {dimension_numbers = #tpu.dot_dimension_numbers<[1], [0], [0], [1], [0, 0, 1, 1], [], []>} : vector<128x8xf32>, vector<8x256xf32>, vector<128x256xf32> -> vector<128x256xf32>
    %c0_5 = arith.constant 0 : index
    %c0_6 = arith.constant 0 : index
    %4 = vector.load %arg4[%c0_5, %c0_6] : memref<8x2xf32, #tpu.memory_space<vmem>>, vector<8x2xf32>
    %cst_7 = arith.constant dense<0.000000e+00> : vector<128x2xf32>
    %5 = tpu.matmul %0, %4, %cst_7 {dimension_numbers = #tpu.dot_dimension_numbers<[1], [0], [0], [1], [0, 0, 1, 1], [], []>} : vector<128x8xf32>, vector<8x2xf32>, vector<128x2xf32> -> vector<128x2xf32>
    %c0_8 = arith.constant 0 : index
    %c0_9 = arith.constant 0 : index
    %6 = vector.load %arg5[%c0_8, %c0_9] : memref<8x2xf32, #tpu.memory_space<vmem>>, vector<8x2xf32>
    %cst_10 = arith.constant dense<0.000000e+00> : vector<128x2xf32>
    %7 = tpu.matmul %1, %6, %cst_10 {dimension_numbers = #tpu.dot_dimension_numbers<[1], [0], [0], [1], [0, 0, 1, 1], [], []>} : vector<128x8xf32>, vector<8x2xf32>, vector<128x2xf32> -> vector<128x2xf32>
    %c0_11 = arith.constant 0 : index
    %c0_12 = arith.constant 0 : index
    %8 = vector.load %arg7[%c0_11, %c0_12] : memref<128x128xf32, #tpu.memory_space<vmem>>, vector<128x128xf32>
    %9 = vector.extract_strided_slice %7 {offsets = [0, 0], sizes = [128, 1], strides = [1, 1]} : vector<128x2xf32> to vector<128x1xf32>
    %10 = vector.extract_strided_slice %5 {offsets = [0, 0], sizes = [128, 1], strides = [1, 1]} : vector<128x2xf32> to vector<128x1xf32>
    %11 = vector.shape_cast %10 : vector<128x1xf32> to vector<1x128xf32>
    %12 = vector.broadcast %9 : vector<128x1xf32> to vector<128x128xf32>
    %13 = vector.broadcast %11 : vector<1x128xf32> to vector<128x128xf32>
    %14 = arith.addf %12, %13 : vector<128x128xf32>
    %cst_13 = arith.constant 0.000000e+00 : f32
    %15 = vector.broadcast %cst_13 : f32 to vector<128x128xf32>
    %16 = arith.cmpf ogt, %14, %15 : vector<128x128xf32>
    %cst_14 = arith.constant 2.000000e-01 : f32
    %17 = vector.broadcast %cst_14 : f32 to vector<128x128xf32>
    %18 = arith.mulf %17, %14 : vector<128x128xf32>
    %19 = arith.select %16, %14, %18 : vector<128x128xi1>, vector<128x128xf32>
    %20 = arith.addf %19, %8 : vector<128x128xf32>
    %cst_15 = arith.constant dense<0xFF800000> : vector<128xf32>
    %21 = vector.multi_reduction <maximumf>, %20, %cst_15 [1] : vector<128x128xf32> to vector<128xf32>
    %22 = vector.shape_cast %21 : vector<128xf32> to vector<128x1xf32>
    %23 = vector.broadcast %22 : vector<128x1xf32> to vector<128x128xf32>
    %24 = arith.subf %20, %23 : vector<128x128xf32>
    %25 = math.exp %24 : vector<128x128xf32>
    %cst_16 = arith.constant dense<0.000000e+00> : vector<128xf32>
    %26 = vector.multi_reduction <add>, %25, %cst_16 [1] : vector<128x128xf32> to vector<128xf32>
    %27 = vector.shape_cast %26 : vector<128xf32> to vector<128x1xf32>
    %28 = tpu.reciprocal %27 {approx = true} : vector<128x1xf32> -> vector<128x1xf32>
    %29 = vector.broadcast %28 : vector<128x1xf32> to vector<128x128xf32>
    %30 = arith.mulf %25, %29 : vector<128x128xf32>
    %31 = vector.extract_strided_slice %3 {offsets = [0, 0], sizes = [128, 128], strides = [1, 1]} : vector<128x256xf32> to vector<128x128xf32>
    %cst_17 = arith.constant dense<0.000000e+00> : vector<128x128xf32>
    %32 = tpu.matmul %30, %31, %cst_17 {dimension_numbers = #tpu.dot_dimension_numbers<[1], [0], [0], [1], [0, 0, 1, 1], [], []>} : vector<128x128xf32>, vector<128x128xf32>, vector<128x128xf32> -> vector<128x128xf32>
    %33 = vector.extract_strided_slice %7 {offsets = [0, 1], sizes = [128, 1], strides = [1, 1]} : vector<128x2xf32> to vector<128x1xf32>
    %34 = vector.extract_strided_slice %5 {offsets = [0, 1], sizes = [128, 1], strides = [1, 1]} : vector<128x2xf32> to vector<128x1xf32>
    %35 = vector.shape_cast %34 : vector<128x1xf32> to vector<1x128xf32>
    %36 = vector.broadcast %33 : vector<128x1xf32> to vector<128x128xf32>
    %37 = vector.broadcast %35 : vector<1x128xf32> to vector<128x128xf32>
    %38 = arith.addf %36, %37 : vector<128x128xf32>
    %cst_18 = arith.constant 0.000000e+00 : f32
    %39 = vector.broadcast %cst_18 : f32 to vector<128x128xf32>
    %40 = arith.cmpf ogt, %38, %39 : vector<128x128xf32>
    %cst_19 = arith.constant 2.000000e-01 : f32
    %41 = vector.broadcast %cst_19 : f32 to vector<128x128xf32>
    %42 = arith.mulf %41, %38 : vector<128x128xf32>
    %43 = arith.select %40, %38, %42 : vector<128x128xi1>, vector<128x128xf32>
    %44 = arith.addf %43, %8 : vector<128x128xf32>
    %cst_20 = arith.constant dense<0xFF800000> : vector<128xf32>
    %45 = vector.multi_reduction <maximumf>, %44, %cst_20 [1] : vector<128x128xf32> to vector<128xf32>
    %46 = vector.shape_cast %45 : vector<128xf32> to vector<128x1xf32>
    %47 = vector.broadcast %46 : vector<128x1xf32> to vector<128x128xf32>
    %48 = arith.subf %44, %47 : vector<128x128xf32>
    %49 = math.exp %48 : vector<128x128xf32>
    %cst_21 = arith.constant dense<0.000000e+00> : vector<128xf32>
    %50 = vector.multi_reduction <add>, %49, %cst_21 [1] : vector<128x128xf32> to vector<128xf32>
    %51 = vector.shape_cast %50 : vector<128xf32> to vector<128x1xf32>
    %52 = tpu.reciprocal %51 {approx = true} : vector<128x1xf32> -> vector<128x1xf32>
    %53 = vector.broadcast %52 : vector<128x1xf32> to vector<128x128xf32>
    %54 = arith.mulf %49, %53 : vector<128x128xf32>
    %55 = vector.extract_strided_slice %3 {offsets = [0, 128], sizes = [128, 128], strides = [1, 1]} : vector<128x256xf32> to vector<128x128xf32>
    %cst_22 = arith.constant dense<0.000000e+00> : vector<128x128xf32>
    %56 = tpu.matmul %54, %55, %cst_22 {dimension_numbers = #tpu.dot_dimension_numbers<[1], [0], [0], [1], [0, 0, 1, 1], [], []>} : vector<128x128xf32>, vector<128x128xf32>, vector<128x128xf32> -> vector<128x128xf32>
    %57 = tpu.concatenate %32, %56 in 1 : vector<128x128xf32>, vector<128x128xf32> -> vector<128x256xf32>
    %c0_23 = arith.constant 0 : index
    %c0_24 = arith.constant 0 : index
    %58 = vector.load %arg6[%c0_23, %c0_24] : memref<1x256xf32, #tpu.memory_space<vmem>>, vector<1x256xf32>
    %59 = vector.broadcast %58 : vector<1x256xf32> to vector<128x256xf32>
    %60 = arith.addf %57, %59 : vector<128x256xf32>
    %cst_25 = arith.constant 0.000000e+00 : f32
    %61 = vector.broadcast %cst_25 : f32 to vector<128x256xf32>
    %62 = arith.cmpf ogt, %60, %61 : vector<128x256xf32>
    %63 = math.exp %60 : vector<128x256xf32>
    %cst_26 = arith.constant 1.000000e+00 : f32
    %64 = vector.broadcast %cst_26 : f32 to vector<128x256xf32>
    %65 = arith.subf %63, %64 : vector<128x256xf32>
    %66 = arith.select %62, %60, %65 : vector<128x256xi1>, vector<128x256xf32>
    %c0_27 = arith.constant 0 : index
    %c0_28 = arith.constant 0 : index
    %67 = vector.load %arg8[%c0_27, %c0_28] : memref<128x256xf32, #tpu.memory_space<vmem>>, vector<128x256xf32>
    tpu.vector_store %arg8[%c0_27, %c0_28], %66 {strides = array<i32>} : memref<128x256xf32, #tpu.memory_space<vmem>>, vector<128x256xf32>,
    return
  }
  func.func @transform_0(%arg0: i32) -> (i32, i32) {
    %c0_i32 = arith.constant 0 : i32
    %c0_i32_0 = arith.constant 0 : i32
    %c0_i32_1 = arith.constant 0 : i32
    return %c0_i32, %c0_i32_0 : i32, i32
  }
  func.func @transform_1(%arg0: i32) -> (i32, i32) {
    %c0_i32 = arith.constant 0 : i32
    %c0_i32_0 = arith.constant 0 : i32
    return %arg0, %c0_i32 : i32, i32
  }
  func.func @transform_2(%arg0: i32) -> (i32, i32) {
    %c0_i32 = arith.constant 0 : i32
    %c0_i32_0 = arith.constant 0 : i32
    %c0_i32_1 = arith.constant 0 : i32
    return %c0_i32, %c0_i32_0 : i32, i32
  }
  func.func @transform_3(%arg0: i32) -> (i32, i32) {
    %c0_i32 = arith.constant 0 : i32
    %c0_i32_0 = arith.constant 0 : i32
    %c0_i32_1 = arith.constant 0 : i32
    return %c0_i32, %c0_i32_0 : i32, i32
  }
  func.func @transform_4(%arg0: i32) -> (i32, i32) {
    %c0_i32 = arith.constant 0 : i32
    %c0_i32_0 = arith.constant 0 : i32
    %c0_i32_1 = arith.constant 0 : i32
    return %c0_i32, %c0_i32_0 : i32, i32
  }
  func.func @transform_5(%arg0: i32) -> (i32, i32) {
    %c0_i32 = arith.constant 0 : i32
    %c0_i32_0 = arith.constant 0 : i32
    %c0_i32_1 = arith.constant 0 : i32
    return %c0_i32, %c0_i32_0 : i32, i32
  }
  func.func @transform_6(%arg0: i32) -> (i32, i32) {
    %c0_i32 = arith.constant 0 : i32
    %c0_i32_0 = arith.constant 0 : i32
    return %arg0, %c0_i32 : i32, i32
  }
  func.func @transform_7(%arg0: i32) -> (i32, i32) {
    %c0_i32 = arith.constant 0 : i32
    %c0_i32_0 = arith.constant 0 : i32
    return %arg0, %c0_i32 : i32, i32
  }
}

</mosaic_0001>

<llo_original>
// kernel: tpu_custom_call.1
$region0: #{tpu_custom_call.1}
  #allocation0 [shape = 'u32[]', space=smem, size = 0x4, offset = 0x4, fixed_abs, tag = 'smem constant byte address 0x4 - core index']
  #allocation1 [shape = 'u32[72,128]{1,0:T(1,128)}', space=vmem, size = 0x9000, scoped, tag = 'internal scratch']
  %s0 = inlined_call_operand.vmem [shape: f32[128,8], index: 0, kind: input, shape index: {}]
  %s1 = inlined_call_operand.vmem [shape: f32[128,8], index: 1, kind: input, shape index: {}]
  %s2 = inlined_call_operand.vmem [shape: f32[8,256], index: 2, kind: input, shape index: {}]
  %s3 = inlined_call_operand.vmem [shape: f32[8,2], index: 3, kind: input, shape index: {}]
  %s4 = inlined_call_operand.vmem [shape: f32[8,2], index: 4, kind: input, shape index: {}]
  %s5 = inlined_call_operand.vmem [shape: f32[1,256], index: 5, kind: input, shape index: {}]
  %s6 = inlined_call_operand.vmem [shape: f32[128,128], index: 6, kind: input, shape index: {}]
  %s7 = inlined_call_operand.hbm [shape: f32[128,256], index: 7, kind: output, shape index: {}]
  %s8 = sld [smem:[#allocation0]]
  $region38: #{tpu_custom_call.1} parent=0
    _
  %s10 = ssub.s32 1, %s8
  %s11 = scalar_select 0, %s10, %s8
  $region1: #{tpu_custom_call.1} parent=0
    #allocation2 [shape = 'u8[131072]{0}', space=vmem, size = 0x20000, scoped, tag = 'output window, operand 0, single buffered']
    #allocation3 [shape = 's32[1]{0}', space=sflag, size = 0x4, scoped, tag = 'scoped memory for tpu_custom_call.1']
    %12 = vsyncpa [#allocation3], 0
    // Predicated region
    $region2: #{tpu_custom_call.1} parent=1 // pred_check
      _
    $region3: #{tpu_custom_call.1} parent=1 // pred_check_branch
      %14 = sbr.rel (0) target = $region5
    $region4: #{tpu_custom_call.1} parent=1 // pred_region
      _
    $region5: #{tpu_custom_call.1} parent=1 // pred_fallthru
      _
    // Predicated region
    $region6: #{tpu_custom_call.1} parent=1 // pred_check
      _
    $region7: #{tpu_custom_call.1} parent=1 // pred_check_branch
      %16 = sbr.rel (0) target = $region9
    $region8: #{tpu_custom_call.1} parent=1 // pred_region
      _
    $region9: #{tpu_custom_call.1} parent=1 // pred_fallthru
      _
    // Predicated region
    $region10: #{tpu_custom_call.1} parent=1 // pred_check
      _
    $region11: #{tpu_custom_call.1} parent=1 // pred_check_branch
      %18 = sbr.rel (0) target = $region13
    $region12: #{tpu_custom_call.1} parent=1 // pred_region
      _
    $region13: #{tpu_custom_call.1} parent=1 // pred_fallthru
      _
    // Predicated region
    $region14: #{tpu_custom_call.1} parent=1 // pred_check
      _
    $region15: #{tpu_custom_call.1} parent=1 // pred_check_branch
      %20 = sbr.rel (0) target = $region17
    $region16: #{tpu_custom_call.1} parent=1 // pred_region
      _
    $region17: #{tpu_custom_call.1} parent=1 // pred_fallthru
      _
    // Predicated region
    $region18: #{tpu_custom_call.1} parent=1 // pred_check
      _
    $region19: #{tpu_custom_call.1} parent=1 // pred_check_branch
      %22 = sbr.rel (0) target = $region21
    $region20: #{tpu_custom_call.1} parent=1 // pred_region
      _
    $region21: #{tpu_custom_call.1} parent=1 // pred_fallthru
      _
    // Predicated region
    $region22: #{tpu_custom_call.1} parent=1 // pred_check
      _
    $region23: #{tpu_custom_call.1} parent=1 // pred_check_branch
      %24 = sbr.rel (0) target = $region25
    $region24: #{tpu_custom_call.1} parent=1 // pred_region
      _
    $region25: #{tpu_custom_call.1} parent=1 // pred_fallthru
      _
    // Predicated region
    $region26: #{tpu_custom_call.1} parent=1 // pred_check
      _
    $region27: #{tpu_custom_call.1} parent=1 // pred_check_branch
      %26 = sbr.rel (0) target = $region29
    $region28: #{tpu_custom_call.1} parent=1 // pred_region
      _
    $region29: #{tpu_custom_call.1} parent=1 // pred_fallthru
      _
    %v27 = vld [vmem:[%s0] sm:$0xff]
    %v28 = vld [vmem:[%s0 + $0x8] sm:$0xff]
    %v29 = vld [vmem:[%s0 + $0x10] sm:$0xff]
    %v30 = vld [vmem:[%s0 + $0x18] sm:$0xff]
    %v31 = vld [vmem:[%s0 + $0x20] sm:$0xff]
    %v32 = vld [vmem:[%s0 + $0x28] sm:$0xff]
    %v33 = vld [vmem:[%s0 + $0x30] sm:$0xff]
    %v34 = vld [vmem:[%s0 + $0x38] sm:$0xff]
    %v35 = vld [vmem:[%s0 + $0x40] sm:$0xff]
    %v36 = vld [vmem:[%s0 + $0x48] sm:$0xff]
    %v37 = vld [vmem:[%s0 + $0x50] sm:$0xff]
    %v38 = vld [vmem:[%s0 + $0x58] sm:$0xff]
    %v39 = vld [vmem:[%s0 + $0x60] sm:$0xff]
    %v40 = vld [vmem:[%s0 + $0x68] sm:$0xff]
    %v41 = vld [vmem:[%s0 + $0x70] sm:$0xff]
    %v42 = vld [vmem:[%s0 + $0x78] sm:$0xff]
    %v43 = vld [vmem:[%s1] sm:$0xff]
    %v44 = vld [vmem:[%s1 + $0x8] sm:$0xff]
    %v45 = vld [vmem:[%s1 + $0x10] sm:$0xff]
    %v46 = vld [vmem:[%s1 + $0x18] sm:$0xff]
    %v47 = vld [vmem:[%s1 + $0x20] sm:$0xff]
    %v48 = vld [vmem:[%s1 + $0x28] sm:$0xff]
    %v49 = vld [vmem:[%s1 + $0x30] sm:$0xff]
    %v50 = vld [vmem:[%s1 + $0x38] sm:$0xff]
    %v51 = vld [vmem:[%s1 + $0x40] sm:$0xff]
    %v52 = vld [vmem:[%s1 + $0x48] sm:$0xff]
    %v53 = vld [vmem:[%s1 + $0x50] sm:$0xff]
    %v54 = vld [vmem:[%s1 + $0x58] sm:$0xff]
    %v55 = vld [vmem:[%s1 + $0x60] sm:$0xff]
    %v56 = vld [vmem:[%s1 + $0x68] sm:$0xff]
    %v57 = vld [vmem:[%s1 + $0x70] sm:$0xff]
    %v58 = vld [vmem:[%s1 + $0x78] sm:$0xff]
    %v59 = vld [vmem:[%s2] sm:$0xff]
    %v60 = vld [vmem:[%s2 + $0x8] sm:$0xff]
    %vm61 = vcmask 64512
    %v63 = vsel %vm61, %v27, 0
    %v66 = vsel %vm61, %v28, 0
    %v69 = vsel %vm61, %v29, 0
    %v72 = vsel %vm61, %v30, 0
    %v75 = vsel %vm61, %v31, 0
    %v78 = vsel %vm61, %v32, 0
    %v81 = vsel %vm61, %v33, 0
    %v84 = vsel %vm61, %v34, 0
    %v87 = vsel %vm61, %v35, 0
    %v90 = vsel %vm61, %v36, 0
    %v93 = vsel %vm61, %v37, 0
    %v96 = vsel %vm61, %v38, 0
    %v99 = vsel %vm61, %v39, 0
    %v102 = vsel %vm61, %v40, 0
    %v105 = vsel %vm61, %v41, 0
    %v108 = vsel %vm61, %v42, 0
    %110 = vmatpush.msra.mxu0 0.0
    %111 = vmatpush.msra.mxu0 0.0
    %112 = vmatpush.msra.mxu0 0.0
    %113 = vmatpush.msra.mxu0 0.0
    %114 = vmatpush.msra.mxu0 0.0
    %115 = vmatpush.msra.mxu0 0.0
    %116 = vmatpush.msra.mxu0 0.0
    %117 = vmatpush.msra.mxu0 0.0
    %118 = vmatpush.msra.mxu0 0.0
    %119 = vmatpush.msra.mxu0 0.0
    %120 = vmatpush.msra.mxu0 0.0
    %121 = vmatpush.msra.mxu0 0.0
    %122 = vmatpush.msra.mxu0 0.0
    %123 = vmatpush.msra.mxu0 0.0
    %124 = vmatpush.msra.mxu0 0.0
    %125 = vmatpush.msra.mxu0 %v59
    %126 = vmatmul.f32.gmra.mxu0 %v63
    %v127 = vpop.f32.mrf.mxu0
    %v128 = vadd.f32 0.0, %v127
    %129 = vmatmul.f32.gmra.mxu0 %v66
    %v130 = vpop.f32.mrf.mxu0
    %v131 = vadd.f32 0.0, %v130
    %132 = vmatmul.f32.gmra.mxu0 %v69
    %v133 = vpop.f32.mrf.mxu0
    %v134 = vadd.f32 0.0, %v133
    %135 = vmatmul.f32.gmra.mxu0 %v72
    %v136 = vpop.f32.mrf.mxu0
    %v137 = vadd.f32 0.0, %v136
    %138 = vmatmul.f32.gmra.mxu0 %v75
    %v139 = vpop.f32.mrf.mxu0
    %v140 = vadd.f32 0.0, %v139
    %141 = vmatmul.f32.gmra.mxu0 %v78
    %v142 = vpop.f32.mrf.mxu0
    %v143 = vadd.f32 0.0, %v142
    %144 = vmatmul.f32.gmra.mxu0 %v81
    %v145 = vpop.f32.mrf.mxu0
    %v146 = vadd.f32 0.0, %v145
    %147 = vmatmul.f32.gmra.mxu0 %v84
    %v148 = vpop.f32.mrf.mxu0
    %v149 = vadd.f32 0.0, %v148
    %150 = vmatmul.f32.gmra.mxu0 %v87
    %v151 = vpop.f32.mrf.mxu0
    %v152 = vadd.f32 0.0, %v151
    %153 = vmatmul.f32.gmra.mxu0 %v90
    %v154 = vpop.f32.mrf.mxu0
    %v155 = vadd.f32 0.0, %v154
    %156 = vmatmul.f32.gmra.mxu0 %v93
    %v157 = vpop.f32.mrf.mxu0
    %v158 = vadd.f32 0.0, %v157
    %159 = vmatmul.f32.gmra.mxu0 %v96
    %v160 = vpop.f32.mrf.mxu0
    %v161 = vadd.f32 0.0, %v160
    %162 = vmatmul.f32.gmra.mxu0 %v99
    %v163 = vpop.f32.mrf.mxu0
    %v164 = vadd.f32 0.0, %v163
    %165 = vmatmul.f32.gmra.mxu0 %v102
    %v166 = vpop.f32.mrf.mxu0
    %v167 = vadd.f32 0.0, %v166
    %168 = vmatmul.f32.gmra.mxu0 %v105
    %v169 = vpop.f32.mrf.mxu0
    %v170 = vadd.f32 0.0, %v169
    %171 = vmatmul.f32.gmra.mxu0 %v108
    %v172 = vpop.f32.mrf.mxu0
    %v173 = vadd.f32 0.0, %v172
    %174 = vdwg.mxu0
    %175 = vmatpush.msra.mxu0 0.0
    %176 = vmatpush.msra.mxu0 0.0
    %177 = vmatpush.msra.mxu0 0.0
    %178 = vmatpush.msra.mxu0 0.0
    %179 = vmatpush.msra.mxu0 0.0
    %180 = vmatpush.msra.mxu0 0.0
    %181 = vmatpush.msra.mxu0 0.0
    %182 = vmatpush.msra.mxu0 0.0
    %183 = vmatpush.msra.mxu0 0.0
    %184 = vmatpush.msra.mxu0 0.0
    %185 = vmatpush.msra.mxu0 0.0
    %186 = vmatpush.msra.mxu0 0.0
    %187 = vmatpush.msra.mxu0 0.0
    %188 = vmatpush.msra.mxu0 0.0
    %189 = vmatpush.msra.mxu0 0.0
    %190 = vmatpush.msra.mxu0 %v60
    %191 = vmatmul.f32.gmra.mxu0 %v63
    %v192 = vpop.f32.mrf.mxu0
    %v193 = vadd.f32 0.0, %v192
    %194 = vmatmul.f32.gmra.mxu0 %v66
    %v195 = vpop.f32.mrf.mxu0
    %v196 = vadd.f32 0.0, %v195
    %197 = vmatmul.f32.gmra.mxu0 %v69
    %v198 = vpop.f32.mrf.mxu0
    %v199 = vadd.f32 0.0, %v198
    %200 = vmatmul.f32.gmra.mxu0 %v72
    %v201 = vpop.f32.mrf.mxu0
    %v202 = vadd.f32 0.0, %v201
    %203 = vmatmul.f32.gmra.mxu0 %v75
    %v204 = vpop.f32.mrf.mxu0
    %v205 = vadd.f32 0.0, %v204
    %206 = vmatmul.f32.gmra.mxu0 %v78
    %v207 = vpop.f32.mrf.mxu0
    %v208 = vadd.f32 0.0, %v207
    %209 = vmatmul.f32.gmra.mxu0 %v81
    %v210 = vpop.f32.mrf.mxu0
    %v211 = vadd.f32 0.0, %v210
    %212 = vmatmul.f32.gmra.mxu0 %v84
    %v213 = vpop.f32.mrf.mxu0
    %v214 = vadd.f32 0.0, %v213
    %215 = vmatmul.f32.gmra.mxu0 %v87
    %v216 = vpop.f32.mrf.mxu0
    %v217 = vadd.f32 0.0, %v216
    %218 = vmatmul.f32.gmra.mxu0 %v90
    %v219 = vpop.f32.mrf.mxu0
    %v220 = vadd.f32 0.0, %v219
    %221 = vmatmul.f32.gmra.mxu0 %v93
    %v222 = vpop.f32.mrf.mxu0
    %v223 = vadd.f32 0.0, %v222
    %224 = vmatmul.f32.gmra.mxu0 %v96
    %v225 = vpop.f32.mrf.mxu0
    %v226 = vadd.f32 0.0, %v225
    %227 = vmatmul.f32.gmra.mxu0 %v99
    %v228 = vpop.f32.mrf.mxu0
    %v229 = vadd.f32 0.0, %v228
    %230 = vmatmul.f32.gmra.mxu0 %v102
    %v231 = vpop.f32.mrf.mxu0
    %v232 = vadd.f32 0.0, %v231
    %233 = vmatmul.f32.gmra.mxu0 %v105
    %v234 = vpop.f32.mrf.mxu0
    %v235 = vadd.f32 0.0, %v234
    %236 = vmatmul.f32.gmra.mxu0 %v108
    %v237 = vpop.f32.mrf.mxu0
    %v238 = vadd.f32 0.0, %v237
    %239 = vdwg.mxu0
    %v240 = vld [vmem:[%s3] sm:$0xff]
    %241 = vmatpush.msra.mxu0 0.0
    %242 = vmatpush.msra.mxu0 0.0
    %243 = vmatpush.msra.mxu0 0.0
    %244 = vmatpush.msra.mxu0 0.0
    %245 = vmatpush.msra.mxu0 0.0
    %246 = vmatpush.msra.mxu0 0.0
    %247 = vmatpush.msra.mxu0 0.0
    %248 = vmatpush.msra.mxu0 0.0
    %249 = vmatpush.msra.mxu0 0.0
    %250 = vmatpush.msra.mxu0 0.0
    %251 = vmatpush.msra.mxu0 0.0
    %252 = vmatpush.msra.mxu0 0.0
    %253 = vmatpush.msra.mxu0 0.0
    %254 = vmatpush.msra.mxu0 0.0
    %255 = vmatpush.msra.mxu0 0.0
    %256 = vmatpush.msra.mxu0 %v240
    %257 = vmatmul.f32.gmra.mxu0 %v63
    %v258 = vpop.f32.mrf.mxu0
    %v259 = vadd.f32 0.0, %v258
    %260 = vmatmul.f32.gmra.mxu0 %v66
    %v261 = vpop.f32.mrf.mxu0
    %v262 = vadd.f32 0.0, %v261
    %263 = vmatmul.f32.gmra.mxu0 %v69
    %v264 = vpop.f32.mrf.mxu0
    %v265 = vadd.f32 0.0, %v264
    %266 = vmatmul.f32.gmra.mxu0 %v72
    %v267 = vpop.f32.mrf.mxu0
    %v268 = vadd.f32 0.0, %v267
    %269 = vmatmul.f32.gmra.mxu0 %v75
    %v270 = vpop.f32.mrf.mxu0
    %v271 = vadd.f32 0.0, %v270
    %272 = vmatmul.f32.gmra.mxu0 %v78
    %v273 = vpop.f32.mrf.mxu0
    %v274 = vadd.f32 0.0, %v273
    %275 = vmatmul.f32.gmra.mxu0 %v81
    %v276 = vpop.f32.mrf.mxu0
    %v277 = vadd.f32 0.0, %v276
    %278 = vmatmul.f32.gmra.mxu0 %v84
    %v279 = vpop.f32.mrf.mxu0
    %v280 = vadd.f32 0.0, %v279
    %281 = vmatmul.f32.gmra.mxu0 %v87
    %v282 = vpop.f32.mrf.mxu0
    %v283 = vadd.f32 0.0, %v282
    %284 = vmatmul.f32.gmra.mxu0 %v90
    %v285 = vpop.f32.mrf.mxu0
    %v286 = vadd.f32 0.0, %v285
    %287 = vmatmul.f32.gmra.mxu0 %v93
    %v288 = vpop.f32.mrf.mxu0
    %v289 = vadd.f32 0.0, %v288
    %290 = vmatmul.f32.gmra.mxu0 %v96
    %v291 = vpop.f32.mrf.mxu0
    %v292 = vadd.f32 0.0, %v291
    %293 = vmatmul.f32.gmra.mxu0 %v99
    %v294 = vpop.f32.mrf.mxu0
    %v295 = vadd.f32 0.0, %v294
    %296 = vmatmul.f32.gmra.mxu0 %v102
    %v297 = vpop.f32.mrf.mxu0
    %v298 = vadd.f32 0.0, %v297
    %299 = vmatmul.f32.gmra.mxu0 %v105
    %v300 = vpop.f32.mrf.mxu0
    %v301 = vadd.f32 0.0, %v300
    %302 = vmatmul.f32.gmra.mxu0 %v108
    %v303 = vpop.f32.mrf.mxu0
    %v304 = vadd.f32 0.0, %v303
    %305 = vdwg.mxu0
    %v306 = vld [vmem:[%s4] sm:$0xff]
    %v308 = vsel %vm61, %v43, 0
    %v311 = vsel %vm61, %v44, 0
    %v314 = vsel %vm61, %v45, 0
    %v317 = vsel %vm61, %v46, 0
    %v320 = vsel %vm61, %v47, 0
    %v323 = vsel %vm61, %v48, 0
    %v326 = vsel %vm61, %v49, 0
    %v329 = vsel %vm61, %v50, 0
    %v332 = vsel %vm61, %v51, 0
    %v335 = vsel %vm61, %v52, 0
    %v338 = vsel %vm61, %v53, 0
    %v341 = vsel %vm61, %v54, 0
    %v344 = vsel %vm61, %v55, 0
    %v347 = vsel %vm61, %v56, 0
    %v350 = vsel %vm61, %v57, 0
    %v353 = vsel %vm61, %v58, 0
    %355 = vmatpush.msra.mxu0 0.0
    %356 = vmatpush.msra.mxu0 0.0
    %357 = vmatpush.msra.mxu0 0.0
    %358 = vmatpush.msra.mxu0 0.0
    %359 = vmatpush.msra.mxu0 0.0
    %360 = vmatpush.msra.mxu0 0.0
    %361 = vmatpush.msra.mxu0 0.0
    %362 = vmatpush.msra.mxu0 0.0
    %363 = vmatpush.msra.mxu0 0.0
    %364 = vmatpush.msra.mxu0 0.0
    %365 = vmatpush.msra.mxu0 0.0
    %366 = vmatpush.msra.mxu0 0.0
    %367 = vmatpush.msra.mxu0 0.0
    %368 = vmatpush.msra.mxu0 0.0
    %369 = vmatpush.msra.mxu0 0.0
    %370 = vmatpush.msra.mxu0 %v306
    %371 = vmatmul.f32.gmra.mxu0 %v308
    %v372 = vpop.f32.mrf.mxu0
    %v373 = vadd.f32 0.0, %v372
    %374 = vmatmul.f32.gmra.mxu0 %v311
    %v375 = vpop.f32.mrf.mxu0
    %v376 = vadd.f32 0.0, %v375
    %377 = vmatmul.f32.gmra.mxu0 %v314
    %v378 = vpop.f32.mrf.mxu0
    %v379 = vadd.f32 0.0, %v378
    %380 = vmatmul.f32.gmra.mxu0 %v317
    %v381 = vpop.f32.mrf.mxu0
    %v382 = vadd.f32 0.0, %v381
    %383 = vmatmul.f32.gmra.mxu0 %v320
    %v384 = vpop.f32.mrf.mxu0
    %v385 = vadd.f32 0.0, %v384
    %386 = vmatmul.f32.gmra.mxu0 %v323
    %v387 = vpop.f32.mrf.mxu0
    %v388 = vadd.f32 0.0, %v387
    %389 = vmatmul.f32.gmra.mxu0 %v326
    %v390 = vpop.f32.mrf.mxu0
    %v391 = vadd.f32 0.0, %v390
    %392 = vmatmul.f32.gmra.mxu0 %v329
    %v393 = vpop.f32.mrf.mxu0
    %v394 = vadd.f32 0.0, %v393
    %395 = vmatmul.f32.gmra.mxu0 %v332
    %v396 = vpop.f32.mrf.mxu0
    %v397 = vadd.f32 0.0, %v396
    %398 = vmatmul.f32.gmra.mxu0 %v335
    %v399 = vpop.f32.mrf.mxu0
    %v400 = vadd.f32 0.0, %v399
    %401 = vmatmul.f32.gmra.mxu0 %v338
    %v402 = vpop.f32.mrf.mxu0
    %v403 = vadd.f32 0.0, %v402
    %404 = vmatmul.f32.gmra.mxu0 %v341
    %v405 = vpop.f32.mrf.mxu0
    %v406 = vadd.f32 0.0, %v405
    %407 = vmatmul.f32.gmra.mxu0 %v344
    %v408 = vpop.f32.mrf.mxu0
    %v409 = vadd.f32 0.0, %v408
    %410 = vmatmul.f32.gmra.mxu0 %v347
    %v411 = vpop.f32.mrf.mxu0
    %v412 = vadd.f32 0.0, %v411
    %413 = vmatmul.f32.gmra.mxu0 %v350
    %v414 = vpop.f32.mrf.mxu0
    %v415 = vadd.f32 0.0, %v414
    %416 = vmatmul.f32.gmra.mxu0 %v353
    %v417 = vpop.f32.mrf.mxu0
    %v418 = vadd.f32 0.0, %v417
    %419 = vdwg.mxu0
    %v420 = vld [vmem:[%s6] sm:$0xff]
    %v421 = vld [vmem:[%s6 + $0x8] sm:$0xff]
    %v422 = vld [vmem:[%s6 + $0x10] sm:$0xff]
    %v423 = vld [vmem:[%s6 + $0x18] sm:$0xff]
    %v424 = vld [vmem:[%s6 + $0x20] sm:$0xff]
    %v425 = vld [vmem:[%s6 + $0x28] sm:$0xff]
    %v426 = vld [vmem:[%s6 + $0x30] sm:$0xff]
    %v427 = vld [vmem:[%s6 + $0x38] sm:$0xff]
    %v428 = vld [vmem:[%s6 + $0x40] sm:$0xff]
    %v429 = vld [vmem:[%s6 + $0x48] sm:$0xff]
    %v430 = vld [vmem:[%s6 + $0x50] sm:$0xff]
    %v431 = vld [vmem:[%s6 + $0x58] sm:$0xff]
    %v432 = vld [vmem:[%s6 + $0x60] sm:$0xff]
    %v433 = vld [vmem:[%s6 + $0x68] sm:$0xff]
    %v434 = vld [vmem:[%s6 + $0x70] sm:$0xff]
    %v435 = vld [vmem:[%s6 + $0x78] sm:$0xff]
    %437 = vset.pattern.permute.xlu0 0
    %438 = vperm.xlu0 %437, %v373
    %v439 = vpop.permute.xlu0 %438
    %442 = vset.pattern.permute.xlu0 0
    %443 = vperm.xlu0 %442, %v376
    %v444 = vpop.permute.xlu0 %443
    %447 = vset.pattern.permute.xlu0 0
    %448 = vperm.xlu0 %447, %v379
    %v449 = vpop.permute.xlu0 %448
    %452 = vset.pattern.permute.xlu0 0
    %453 = vperm.xlu0 %452, %v382
    %v454 = vpop.permute.xlu0 %453
    %457 = vset.pattern.permute.xlu0 0
    %458 = vperm.xlu0 %457, %v385
    %v459 = vpop.permute.xlu0 %458
    %462 = vset.pattern.permute.xlu0 0
    %463 = vperm.xlu0 %462, %v388
    %v464 = vpop.permute.xlu0 %463
    %467 = vset.pattern.permute.xlu0 0
    %468 = vperm.xlu0 %467, %v391
    %v469 = vpop.permute.xlu0 %468
    %472 = vset.pattern.permute.xlu0 0
    %473 = vperm.xlu0 %472, %v394
    %v474 = vpop.permute.xlu0 %473
    %477 = vset.pattern.permute.xlu0 0
    %478 = vperm.xlu0 %477, %v397
    %v479 = vpop.permute.xlu0 %478
    %482 = vset.pattern.permute.xlu0 0
    %483 = vperm.xlu0 %482, %v400
    %v484 = vpop.permute.xlu0 %483
    %487 = vset.pattern.permute.xlu0 0
    %488 = vperm.xlu0 %487, %v403
    %v489 = vpop.permute.xlu0 %488
    %492 = vset.pattern.permute.xlu0 0
    %493 = vperm.xlu0 %492, %v406
    %v494 = vpop.permute.xlu0 %493
    %497 = vset.pattern.permute.xlu0 0
    %498 = vperm.xlu0 %497, %v409
    %v499 = vpop.permute.xlu0 %498
    %502 = vset.pattern.permute.xlu0 0
    %503 = vperm.xlu0 %502, %v412
    %v504 = vpop.permute.xlu0 %503
    %507 = vset.pattern.permute.xlu0 0
    %508 = vperm.xlu0 %507, %v415
    %v509 = vpop.permute.xlu0 %508
    %512 = vset.pattern.permute.xlu0 0
    %513 = vperm.xlu0 %512, %v418
    %v514 = vpop.permute.xlu0 %513
    %532 = vset.pattern.permute.xlu0 0
    %533 = vperm.xlu0 %532, %v259
    %v534 = vpop.permute.xlu0 %533
    %535 = vset.pattern.permute.xlu0 0
    %536 = vperm.xlu0 %535, %v262
    %v537 = vpop.permute.xlu0 %536
    %538 = vset.pattern.permute.xlu0 0
    %539 = vperm.xlu0 %538, %v265
    %v540 = vpop.permute.xlu0 %539
    %541 = vset.pattern.permute.xlu0 0
    %542 = vperm.xlu0 %541, %v268
    %v543 = vpop.permute.xlu0 %542
    %544 = vset.pattern.permute.xlu0 0
    %545 = vperm.xlu0 %544, %v271
    %v546 = vpop.permute.xlu0 %545
    %547 = vset.pattern.permute.xlu0 0
    %548 = vperm.xlu0 %547, %v274
    %v549 = vpop.permute.xlu0 %548
    %550 = vset.pattern.permute.xlu0 0
    %551 = vperm.xlu0 %550, %v277
    %v552 = vpop.permute.xlu0 %551
    %553 = vset.pattern.permute.xlu0 0
    %554 = vperm.xlu0 %553, %v280
    %v555 = vpop.permute.xlu0 %554
    %556 = vset.pattern.permute.xlu0 0
    %557 = vperm.xlu0 %556, %v283
    %v558 = vpop.permute.xlu0 %557
    %559 = vset.pattern.permute.xlu0 0
    %560 = vperm.xlu0 %559, %v286
    %v561 = vpop.permute.xlu0 %560
    %562 = vset.pattern.permute.xlu0 0
    %563 = vperm.xlu0 %562, %v289
    %v564 = vpop.permute.xlu0 %563
    %565 = vset.pattern.permute.xlu0 0
    %566 = vperm.xlu0 %565, %v292
    %v567 = vpop.permute.xlu0 %566
    %568 = vset.pattern.permute.xlu0 0
    %569 = vperm.xlu0 %568, %v295
    %v570 = vpop.permute.xlu0 %569
    %571 = vset.pattern.permute.xlu0 0
    %572 = vperm.xlu0 %571, %v298
    %v573 = vpop.permute.xlu0 %572
    %574 = vset.pattern.permute.xlu0 0
    %575 = vperm.xlu0 %574, %v301
    %v576 = vpop.permute.xlu0 %575
    %577 = vset.pattern.permute.xlu0 0
    %578 = vperm.xlu0 %577, %v304
    %v579 = vpop.permute.xlu0 %578
    %v580 = vlaneseq
    %v581 = vand.u32 %v580, 127
    %v582 = vperm.slane %v534, %v581
    %v583 = vadd.s32 %v581, 4294967288
    %v584 = vperm.slane %v537, %v583
    %vm585 = vcmask 130112
    %v586 = vsel %vm585, %v584, %v582
    %v587 = vadd.s32 %v581, 4294967280
    %v588 = vperm.slane %v540, %v587
    %vm589 = vcmask 195712
    %v590 = vsel %vm589, %v588, %v586
    %v591 = vadd.s32 %v581, 4294967272
    %v592 = vperm.slane %v543, %v591
    %vm593 = vcmask 261312
    %v594 = vsel %vm593, %v592, %v590
    %v595 = vadd.s32 %v581, 4294967264
    %v596 = vperm.slane %v546, %v595
    %vm597 = vcmask 326912
    %v598 = vsel %vm597, %v596, %v594
    %v599 = vadd.s32 %v581, 4294967256
    %v600 = vperm.slane %v549, %v599
    %vm601 = vcmask 392512
    %v602 = vsel %vm601, %v600, %v598
    %v603 = vadd.s32 %v581, 4294967248
    %v604 = vperm.slane %v552, %v603
    %vm605 = vcmask 458112
    %v606 = vsel %vm605, %v604, %v602
    %v607 = vadd.s32 %v581, 4294967240
    %v608 = vperm.slane %v555, %v607
    %vm609 = vcmask 523712
    %v610 = vsel %vm609, %v608, %v606
    %v611 = vadd.s32 %v581, 4294967232
    %v612 = vperm.slane %v558, %v611
    %vm613 = vcmask 589312
    %v614 = vsel %vm613, %v612, %v610
    %v615 = vadd.s32 %v581, 4294967224
    %v616 = vperm.slane %v561, %v615
    %vm617 = vcmask 654912
    %v618 = vsel %vm617, %v616, %v614
    %v619 = vadd.s32 %v581, 4294967216
    %v620 = vperm.slane %v564, %v619
    %vm621 = vcmask 720512
    %v622 = vsel %vm621, %v620, %v618
    %v623 = vadd.s32 %v581, 4294967208
    %v624 = vperm.slane %v567, %v623
    %vm625 = vcmask 786112
    %v626 = vsel %vm625, %v624, %v622
    %v627 = vadd.s32 %v581, 4294967200
    %v628 = vperm.slane %v570, %v627
    %vm629 = vcmask 851712
    %v630 = vsel %vm629, %v628, %v626
    %v631 = vadd.s32 %v581, 4294967192
    %v632 = vperm.slane %v573, %v631
    %vm633 = vcmask 917312
    %v634 = vsel %vm633, %v632, %v630
    %v635 = vadd.s32 %v581, 4294967184
    %v636 = vperm.slane %v576, %v635
    %vm637 = vcmask 982912
    %v638 = vsel %vm637, %v636, %v634
    %v639 = vadd.s32 %v581, 4294967176
    %v640 = vperm.slane %v579, %v639
    %vm641 = vcmask 1048512
    %v642 = vsel %vm641, %v640, %v638
    %vm643 = vcmask 1042434
    %v644 = vsel %vm643, %v642, %v642
    %vm645 = vcmask 1043459
    %v646 = vsel %vm645, %v642, %v644
    %vm647 = vcmask 1044484
    %v648 = vsel %vm647, %v642, %v646
    %vm649 = vcmask 1045509
    %v650 = vsel %vm649, %v642, %v648
    %vm651 = vcmask 1046534
    %v652 = vsel %vm651, %v642, %v650
    %vm653 = vcmask 1047559
    %v654 = vsel %vm653, %v642, %v652
    %v656 = vadd.f32 %v439, %v654
    %v657 = vadd.f32 %v444, %v654
    %v658 = vadd.f32 %v449, %v654
    %v659 = vadd.f32 %v454, %v654
    %v660 = vadd.f32 %v459, %v654
    %v661 = vadd.f32 %v464, %v654
    %v662 = vadd.f32 %v469, %v654
    %v663 = vadd.f32 %v474, %v654
    %v664 = vadd.f32 %v479, %v654
    %v665 = vadd.f32 %v484, %v654
    %v666 = vadd.f32 %v489, %v654
    %v667 = vadd.f32 %v494, %v654
    %v668 = vadd.f32 %v499, %v654
    %v669 = vadd.f32 %v504, %v654
    %v670 = vadd.f32 %v509, %v654
    %v671 = vadd.f32 %v514, %v654
    %vm672 = vcmp.gt.f32.partialorder %v656, 0.0
    %vm673 = vcmp.gt.f32.partialorder %v657, 0.0
    %vm674 = vcmp.gt.f32.partialorder %v658, 0.0
    %vm675 = vcmp.gt.f32.partialorder %v659, 0.0
    %vm676 = vcmp.gt.f32.partialorder %v660, 0.0
    %vm677 = vcmp.gt.f32.partialorder %v661, 0.0
    %vm678 = vcmp.gt.f32.partialorder %v662, 0.0
    %vm679 = vcmp.gt.f32.partialorder %v663, 0.0
    %vm680 = vcmp.gt.f32.partialorder %v664, 0.0
    %vm681 = vcmp.gt.f32.partialorder %v665, 0.0
    %vm682 = vcmp.gt.f32.partialorder %v666, 0.0
    %vm683 = vcmp.gt.f32.partialorder %v667, 0.0
    %vm684 = vcmp.gt.f32.partialorder %v668, 0.0
    %vm685 = vcmp.gt.f32.partialorder %v669, 0.0
    %vm686 = vcmp.gt.f32.partialorder %v670, 0.0
    %vm687 = vcmp.gt.f32.partialorder %v671, 0.0
    %v688 = vmul.f32 %v656, 0.2
    %v689 = vmul.f32 %v657, 0.2
    %v690 = vmul.f32 %v658, 0.2
    %v691 = vmul.f32 %v659, 0.2
    %v692 = vmul.f32 %v660, 0.2
    %v693 = vmul.f32 %v661, 0.2
    %v694 = vmul.f32 %v662, 0.2
    %v695 = vmul.f32 %v663, 0.2
    %v696 = vmul.f32 %v664, 0.2
    %v697 = vmul.f32 %v665, 0.2
    %v698 = vmul.f32 %v666, 0.2
    %v699 = vmul.f32 %v667, 0.2
    %v700 = vmul.f32 %v668, 0.2
    %v701 = vmul.f32 %v669, 0.2
    %v702 = vmul.f32 %v670, 0.2
    %v703 = vmul.f32 %v671, 0.2
    %v704 = vsel %vm672, %v656, %v688
    %v705 = vsel %vm673, %v657, %v689
    %v706 = vsel %vm674, %v658, %v690
    %v707 = vsel %vm675, %v659, %v691
    %v708 = vsel %vm676, %v660, %v692
    %v709 = vsel %vm677, %v661, %v693
    %v710 = vsel %vm678, %v662, %v694
    %v711 = vsel %vm679, %v663, %v695
    %v712 = vsel %vm680, %v664, %v696
    %v713 = vsel %vm681, %v665, %v697
    %v714 = vsel %vm682, %v666, %v698
    %v715 = vsel %vm683, %v667, %v699
    %v716 = vsel %vm684, %v668, %v700
    %v717 = vsel %vm685, %v669, %v701
    %v718 = vsel %vm686, %v670, %v702
    %v719 = vsel %vm687, %v671, %v703
    %v720 = vadd.f32 %v704, %v420
    %v721 = vadd.f32 %v705, %v421
    %v722 = vadd.f32 %v706, %v422
    %v723 = vadd.f32 %v707, %v423
    %v724 = vadd.f32 %v708, %v424
    %v725 = vadd.f32 %v709, %v425
    %v726 = vadd.f32 %v710, %v426
    %v727 = vadd.f32 %v711, %v427
    %v728 = vadd.f32 %v712, %v428
    %v729 = vadd.f32 %v713, %v429
    %v730 = vadd.f32 %v714, %v430
    %v731 = vadd.f32 %v715, %v431
    %v732 = vadd.f32 %v716, %v432
    %v733 = vadd.f32 %v717, %v433
    %v734 = vadd.f32 %v718, %v434
    %v735 = vadd.f32 %v719, %v435
    %736 = vmax.xlane.f32.xlu0 %v720
    %v737 = vpop.xlane.xlu0 %736
    %738 = vmax.xlane.f32.xlu0 %v721
    %v739 = vpop.xlane.xlu0 %738
    %740 = vmax.xlane.f32.xlu0 %v722
    %v741 = vpop.xlane.xlu0 %740
    %742 = vmax.xlane.f32.xlu0 %v723
    %v743 = vpop.xlane.xlu0 %742
    %744 = vmax.xlane.f32.xlu0 %v724
    %v745 = vpop.xlane.xlu0 %744
    %746 = vmax.xlane.f32.xlu0 %v725
    %v747 = vpop.xlane.xlu0 %746
    %748 = vmax.xlane.f32.xlu0 %v726
    %v749 = vpop.xlane.xlu0 %748
    %750 = vmax.xlane.f32.xlu0 %v727
    %v751 = vpop.xlane.xlu0 %750
    %752 = vmax.xlane.f32.xlu0 %v728
    %v753 = vpop.xlane.xlu0 %752
    %754 = vmax.xlane.f32.xlu0 %v729
    %v755 = vpop.xlane.xlu0 %754
    %756 = vmax.xlane.f32.xlu0 %v730
    %v757 = vpop.xlane.xlu0 %756
    %758 = vmax.xlane.f32.xlu0 %v731
    %v759 = vpop.xlane.xlu0 %758
    %760 = vmax.xlane.f32.xlu0 %v732
    %v761 = vpop.xlane.xlu0 %760
    %762 = vmax.xlane.f32.xlu0 %v733
    %v763 = vpop.xlane.xlu0 %762
    %764 = vmax.xlane.f32.xlu0 %v734
    %v765 = vpop.xlane.xlu0 %764
    %766 = vmax.xlane.f32.xlu0 %v735
    %v767 = vpop.xlane.xlu0 %766
    %v768 = vsub.f32 %v720, %v737
    %v769 = vsub.f32 %v721, %v739
    %v770 = vsub.f32 %v722, %v741
    %v771 = vsub.f32 %v723, %v743
    %v772 = vsub.f32 %v724, %v745
    %v773 = vsub.f32 %v725, %v747
    %v774 = vsub.f32 %v726, %v749
    %v775 = vsub.f32 %v727, %v751
    %v776 = vsub.f32 %v728, %v753
    %v777 = vsub.f32 %v729, %v755
    %v778 = vsub.f32 %v730, %v757
    %v779 = vsub.f32 %v731, %v759
    %v780 = vsub.f32 %v732, %v761
    %v781 = vsub.f32 %v733, %v763
    %v782 = vsub.f32 %v734, %v765
    %v783 = vsub.f32 %v735, %v767
    %v784 = vmul.f32 %v768, 1.442695
    %v785 = vpow.pop %v784
    %v786 = vmul.f32 %v769, 1.442695
    %v787 = vpow.pop %v786
    %v788 = vmul.f32 %v770, 1.442695
    %v789 = vpow.pop %v788
    %v790 = vmul.f32 %v771, 1.442695
    %v791 = vpow.pop %v790
    %v792 = vmul.f32 %v772, 1.442695
    %v793 = vpow.pop %v792
    %v794 = vmul.f32 %v773, 1.442695
    %v795 = vpow.pop %v794
    %v796 = vmul.f32 %v774, 1.442695
    %v797 = vpow.pop %v796
    %v798 = vmul.f32 %v775, 1.442695
    %v799 = vpow.pop %v798
    %v800 = vmul.f32 %v776, 1.442695
    %v801 = vpow.pop %v800
    %v802 = vmul.f32 %v777, 1.442695
    %v803 = vpow.pop %v802
    %v804 = vmul.f32 %v778, 1.442695
    %v805 = vpow.pop %v804
    %v806 = vmul.f32 %v779, 1.442695
    %v807 = vpow.pop %v806
    %v808 = vmul.f32 %v780, 1.442695
    %v809 = vpow.pop %v808
    %v810 = vmul.f32 %v781, 1.442695
    %v811 = vpow.pop %v810
    %v812 = vmul.f32 %v782, 1.442695
    %v813 = vpow.pop %v812
    %v814 = vmul.f32 %v783, 1.442695
    %v815 = vpow.pop %v814
    %816 = vadd.xlane.f32.xlu0 %v785
    %v817 = vpop.xlane.xlu0 %816
    %818 = vadd.xlane.f32.xlu0 %v787
    %v819 = vpop.xlane.xlu0 %818
    %820 = vadd.xlane.f32.xlu0 %v789
    %v821 = vpop.xlane.xlu0 %820
    %822 = vadd.xlane.f32.xlu0 %v791
    %v823 = vpop.xlane.xlu0 %822
    %824 = vadd.xlane.f32.xlu0 %v793
    %v825 = vpop.xlane.xlu0 %824
    %826 = vadd.xlane.f32.xlu0 %v795
    %v827 = vpop.xlane.xlu0 %826
    %828 = vadd.xlane.f32.xlu0 %v797
    %v829 = vpop.xlane.xlu0 %828
    %830 = vadd.xlane.f32.xlu0 %v799
    %v831 = vpop.xlane.xlu0 %830
    %832 = vadd.xlane.f32.xlu0 %v801
    %v833 = vpop.xlane.xlu0 %832
    %834 = vadd.xlane.f32.xlu0 %v803
    %v835 = vpop.xlane.xlu0 %834
    %836 = vadd.xlane.f32.xlu0 %v805
    %v837 = vpop.xlane.xlu0 %836
    %838 = vadd.xlane.f32.xlu0 %v807
    %v839 = vpop.xlane.xlu0 %838
    %840 = vadd.xlane.f32.xlu0 %v809
    %v841 = vpop.xlane.xlu0 %840
    %842 = vadd.xlane.f32.xlu0 %v811
    %v843 = vpop.xlane.xlu0 %842
    %844 = vadd.xlane.f32.xlu0 %v813
    %v845 = vpop.xlane.xlu0 %844
    %846 = vadd.xlane.f32.xlu0 %v815
    %v847 = vpop.xlane.xlu0 %846
    %v848 = vrcp.pop %v817
    %v849 = vrcp.pop %v819
    %v850 = vrcp.pop %v821
    %v851 = vrcp.pop %v823
    %v852 = vrcp.pop %v825
    %v853 = vrcp.pop %v827
    %v854 = vrcp.pop %v829
    %v855 = vrcp.pop %v831
    %v856 = vrcp.pop %v833
    %v857 = vrcp.pop %v835
    %v858 = vrcp.pop %v837
    %v859 = vrcp.pop %v839
    %v860 = vrcp.pop %v841
    %v861 = vrcp.pop %v843
    %v862 = vrcp.pop %v845
    %v863 = vrcp.pop %v847
    %v864 = vmul.f32 %v785, %v848
    %v865 = vmul.f32 %v787, %v849
    %v866 = vmul.f32 %v789, %v850
    %v867 = vmul.f32 %v791, %v851
    %v868 = vmul.f32 %v793, %v852
    %v869 = vmul.f32 %v795, %v853
    %v870 = vmul.f32 %v797, %v854
    %v871 = vmul.f32 %v799, %v855
    %v872 = vmul.f32 %v801, %v856
    %v873 = vmul.f32 %v803, %v857
    %v874 = vmul.f32 %v805, %v858
    %v875 = vmul.f32 %v807, %v859
    %v876 = vmul.f32 %v809, %v860
    %v877 = vmul.f32 %v811, %v861
    %v878 = vmul.f32 %v813, %v862
    %v879 = vmul.f32 %v815, %v863
    %880 = vmatpush.msra.mxu0 %v173
    %881 = vmatpush.msra.mxu0 %v170
    %882 = vmatpush.msra.mxu0 %v167
    %883 = vmatpush.msra.mxu0 %v164
    %884 = vmatpush.msra.mxu0 %v161
    %885 = vmatpush.msra.mxu0 %v158
    %886 = vmatpush.msra.mxu0 %v155
    %887 = vmatpush.msra.mxu0 %v152
    %888 = vmatpush.msra.mxu0 %v149
    %889 = vmatpush.msra.mxu0 %v146
    %890 = vmatpush.msra.mxu0 %v143
    %891 = vmatpush.msra.mxu0 %v140
    %892 = vmatpush.msra.mxu0 %v137
    %893 = vmatpush.msra.mxu0 %v134
    %894 = vmatpush.msra.mxu0 %v131
    %895 = vmatpush.msra.mxu0 %v128
    %896 = vmatmul.f32.gmra.mxu0 %v864
    %v897 = vpop.f32.mrf.mxu0
    %v898 = vadd.f32 0.0, %v897
    %899 = vmatmul.f32.gmra.mxu0 %v865
    %v900 = vpop.f32.mrf.mxu0
    %v901 = vadd.f32 0.0, %v900
    %902 = vmatmul.f32.gmra.mxu0 %v866
    %v903 = vpop.f32.mrf.mxu0
    %v904 = vadd.f32 0.0, %v903
    %905 = vmatmul.f32.gmra.mxu0 %v867
    %v906 = vpop.f32.mrf.mxu0
    %v907 = vadd.f32 0.0, %v906
    %908 = vmatmul.f32.gmra.mxu0 %v868
    %v909 = vpop.f32.mrf.mxu0
    %v910 = vadd.f32 0.0, %v909
    %911 = vmatmul.f32.gmra.mxu0 %v869
    %v912 = vpop.f32.mrf.mxu0
    %v913 = vadd.f32 0.0, %v912
    %914 = vmatmul.f32.gmra.mxu0 %v870
    %v915 = vpop.f32.mrf.mxu0
    %v916 = vadd.f32 0.0, %v915
    %917 = vmatmul.f32.gmra.mxu0 %v871
    %v918 = vpop.f32.mrf.mxu0
    %v919 = vadd.f32 0.0, %v918
    %920 = vmatmul.f32.gmra.mxu0 %v872
    %v921 = vpop.f32.mrf.mxu0
    %v922 = vadd.f32 0.0, %v921
    %923 = vmatmul.f32.gmra.mxu0 %v873
    %v924 = vpop.f32.mrf.mxu0
    %v925 = vadd.f32 0.0, %v924
    %926 = vmatmul.f32.gmra.mxu0 %v874
    %v927 = vpop.f32.mrf.mxu0
    %v928 = vadd.f32 0.0, %v927
    %929 = vmatmul.f32.gmra.mxu0 %v875
    %v930 = vpop.f32.mrf.mxu0
    %v931 = vadd.f32 0.0, %v930
    %932 = vmatmul.f32.gmra.mxu0 %v876
    %v933 = vpop.f32.mrf.mxu0
    %v934 = vadd.f32 0.0, %v933
    %935 = vmatmul.f32.gmra.mxu0 %v877
    %v936 = vpop.f32.mrf.mxu0
    %v937 = vadd.f32 0.0, %v936
    %938 = vmatmul.f32.gmra.mxu0 %v878
    %v939 = vpop.f32.mrf.mxu0
    %v940 = vadd.f32 0.0, %v939
    %941 = vmatmul.f32.gmra.mxu0 %v879
    %v942 = vpop.f32.mrf.mxu0
    %v943 = vadd.f32 0.0, %v942
    %944 = vdwg.mxu0
    %945 = vset.pattern.permute.xlu0 1
    %946 = vperm.xlu0 %945, %v373
    %v947 = vpop.permute.xlu0 %946
    %949 = vset.pattern.permute.xlu0 1
    %950 = vperm.xlu0 %949, %v376
    %v951 = vpop.permute.xlu0 %950
    %953 = vset.pattern.permute.xlu0 1
    %954 = vperm.xlu0 %953, %v379
    %v955 = vpop.permute.xlu0 %954
    %957 = vset.pattern.permute.xlu0 1
    %958 = vperm.xlu0 %957, %v382
    %v959 = vpop.permute.xlu0 %958
    %961 = vset.pattern.permute.xlu0 1
    %962 = vperm.xlu0 %961, %v385
    %v963 = vpop.permute.xlu0 %962
    %965 = vset.pattern.permute.xlu0 1
    %966 = vperm.xlu0 %965, %v388
    %v967 = vpop.permute.xlu0 %966
    %969 = vset.pattern.permute.xlu0 1
    %970 = vperm.xlu0 %969, %v391
    %v971 = vpop.permute.xlu0 %970
    %973 = vset.pattern.permute.xlu0 1
    %974 = vperm.xlu0 %973, %v394
    %v975 = vpop.permute.xlu0 %974
    %977 = vset.pattern.permute.xlu0 1
    %978 = vperm.xlu0 %977, %v397
    %v979 = vpop.permute.xlu0 %978
    %981 = vset.pattern.permute.xlu0 1
    %982 = vperm.xlu0 %981, %v400
    %v983 = vpop.permute.xlu0 %982
    %985 = vset.pattern.permute.xlu0 1
    %986 = vperm.xlu0 %985, %v403
    %v987 = vpop.permute.xlu0 %986
    %989 = vset.pattern.permute.xlu0 1
    %990 = vperm.xlu0 %989, %v406
    %v991 = vpop.permute.xlu0 %990
    %993 = vset.pattern.permute.xlu0 1
    %994 = vperm.xlu0 %993, %v409
    %v995 = vpop.permute.xlu0 %994
    %997 = vset.pattern.permute.xlu0 1
    %998 = vperm.xlu0 %997, %v412
    %v999 = vpop.permute.xlu0 %998
    %1001 = vset.pattern.permute.xlu0 1
    %1002 = vperm.xlu0 %1001, %v415
    %v1003 = vpop.permute.xlu0 %1002
    %1005 = vset.pattern.permute.xlu0 1
    %1006 = vperm.xlu0 %1005, %v418
    %v1007 = vpop.permute.xlu0 %1006
    %1009 = vset.pattern.permute.xlu0 1
    %1010 = vperm.xlu0 %1009, %v259
    %v1011 = vpop.permute.xlu0 %1010
    %1012 = vset.pattern.permute.xlu0 1
    %1013 = vperm.xlu0 %1012, %v262
    %v1014 = vpop.permute.xlu0 %1013
    %1015 = vset.pattern.permute.xlu0 1
    %1016 = vperm.xlu0 %1015, %v265
    %v1017 = vpop.permute.xlu0 %1016
    %1018 = vset.pattern.permute.xlu0 1
    %1019 = vperm.xlu0 %1018, %v268
    %v1020 = vpop.permute.xlu0 %1019
    %1021 = vset.pattern.permute.xlu0 1
    %1022 = vperm.xlu0 %1021, %v271
    %v1023 = vpop.permute.xlu0 %1022
    %1024 = vset.pattern.permute.xlu0 1
    %1025 = vperm.xlu0 %1024, %v274
    %v1026 = vpop.permute.xlu0 %1025
    %1027 = vset.pattern.permute.xlu0 1
    %1028 = vperm.xlu0 %1027, %v277
    %v1029 = vpop.permute.xlu0 %1028
    %1030 = vset.pattern.permute.xlu0 1
    %1031 = vperm.xlu0 %1030, %v280
    %v1032 = vpop.permute.xlu0 %1031
    %1033 = vset.pattern.permute.xlu0 1
    %1034 = vperm.xlu0 %1033, %v283
    %v1035 = vpop.permute.xlu0 %1034
    %1036 = vset.pattern.permute.xlu0 1
    %1037 = vperm.xlu0 %1036, %v286
    %v1038 = vpop.permute.xlu0 %1037
    %1039 = vset.pattern.permute.xlu0 1
    %1040 = vperm.xlu0 %1039, %v289
    %v1041 = vpop.permute.xlu0 %1040
    %1042 = vset.pattern.permute.xlu0 1
    %1043 = vperm.xlu0 %1042, %v292
    %v1044 = vpop.permute.xlu0 %1043
    %1045 = vset.pattern.permute.xlu0 1
    %1046 = vperm.xlu0 %1045, %v295
    %v1047 = vpop.permute.xlu0 %1046
    %1048 = vset.pattern.permute.xlu0 1
    %1049 = vperm.xlu0 %1048, %v298
    %v1050 = vpop.permute.xlu0 %1049
    %1051 = vset.pattern.permute.xlu0 1
    %1052 = vperm.xlu0 %1051, %v301
    %v1053 = vpop.permute.xlu0 %1052
    %1054 = vset.pattern.permute.xlu0 1
    %1055 = vperm.xlu0 %1054, %v304
    %v1056 = vpop.permute.xlu0 %1055
    %v1057 = vperm.slane %v1011, %v581
    %v1058 = vperm.slane %v1014, %v583
    %v1059 = vsel %vm585, %v1058, %v1057
    %v1060 = vperm.slane %v1017, %v587
    %v1061 = vsel %vm589, %v1060, %v1059
    %v1062 = vperm.slane %v1020, %v591
    %v1063 = vsel %vm593, %v1062, %v1061
    %v1064 = vperm.slane %v1023, %v595
    %v1065 = vsel %vm597, %v1064, %v1063
    %v1066 = vperm.slane %v1026, %v599
    %v1067 = vsel %vm601, %v1066, %v1065
    %v1068 = vperm.slane %v1029, %v603
    %v1069 = vsel %vm605, %v1068, %v1067
    %v1070 = vperm.slane %v1032, %v607
    %v1071 = vsel %vm609, %v1070, %v1069
    %v1072 = vperm.slane %v1035, %v611
    %v1073 = vsel %vm613, %v1072, %v1071
    %v1074 = vperm.slane %v1038, %v615
    %v1075 = vsel %vm617, %v1074, %v1073
    %v1076 = vperm.slane %v1041, %v619
    %v1077 = vsel %vm621, %v1076, %v1075
    %v1078 = vperm.slane %v1044, %v623
    %v1079 = vsel %vm625, %v1078, %v1077
    %v1080 = vperm.slane %v1047, %v627
    %v1081 = vsel %vm629, %v1080, %v1079
    %v1082 = vperm.slane %v1050, %v631
    %v1083 = vsel %vm633, %v1082, %v1081
    %v1084 = vperm.slane %v1053, %v635
    %v1085 = vsel %vm637, %v1084, %v1083
    %v1086 = vperm.slane %v1056, %v639
    %v1087 = vsel %vm641, %v1086, %v1085
    %v1088 = vsel %vm643, %v1087, %v1087
    %v1089 = vsel %vm645, %v1087, %v1088
    %v1090 = vsel %vm647, %v1087, %v1089
    %v1091 = vsel %vm649, %v1087, %v1090
    %v1092 = vsel %vm651, %v1087, %v1091
    %v1093 = vsel %vm653, %v1087, %v1092
    %v1095 = vadd.f32 %v947, %v1093
    %v1096 = vadd.f32 %v951, %v1093
    %v1097 = vadd.f32 %v955, %v1093
    %v1098 = vadd.f32 %v959, %v1093
    %v1099 = vadd.f32 %v963, %v1093
    %v1100 = vadd.f32 %v967, %v1093
    %v1101 = vadd.f32 %v971, %v1093
    %v1102 = vadd.f32 %v975, %v1093
    %v1103 = vadd.f32 %v979, %v1093
    %v1104 = vadd.f32 %v983, %v1093
    %v1105 = vadd.f32 %v987, %v1093
    %v1106 = vadd.f32 %v991, %v1093
    %v1107 = vadd.f32 %v995, %v1093
    %v1108 = vadd.f32 %v999, %v1093
    %v1109 = vadd.f32 %v1003, %v1093
    %v1110 = vadd.f32 %v1007, %v1093
    %vm1111 = vcmp.gt.f32.partialorder %v1095, 0.0
    %vm1112 = vcmp.gt.f32.partialorder %v1096, 0.0
    %vm1113 = vcmp.gt.f32.partialorder %v1097, 0.0
    %vm1114 = vcmp.gt.f32.partialorder %v1098, 0.0
    %vm1115 = vcmp.gt.f32.partialorder %v1099, 0.0
    %vm1116 = vcmp.gt.f32.partialorder %v1100, 0.0
    %vm1117 = vcmp.gt.f32.partialorder %v1101, 0.0
    %vm1118 = vcmp.gt.f32.partialorder %v1102, 0.0
    %vm1119 = vcmp.gt.f32.partialorder %v1103, 0.0
    %vm1120 = vcmp.gt.f32.partialorder %v1104, 0.0
    %vm1121 = vcmp.gt.f32.partialorder %v1105, 0.0
    %vm1122 = vcmp.gt.f32.partialorder %v1106, 0.0
    %vm1123 = vcmp.gt.f32.partialorder %v1107, 0.0
    %vm1124 = vcmp.gt.f32.partialorder %v1108, 0.0
    %vm1125 = vcmp.gt.f32.partialorder %v1109, 0.0
    %vm1126 = vcmp.gt.f32.partialorder %v1110, 0.0
    %v1127 = vmul.f32 %v1095, 0.2
    %v1128 = vmul.f32 %v1096, 0.2
    %v1129 = vmul.f32 %v1097, 0.2
    %v1130 = vmul.f32 %v1098, 0.2
    %v1131 = vmul.f32 %v1099, 0.2
    %v1132 = vmul.f32 %v1100, 0.2
    %v1133 = vmul.f32 %v1101, 0.2
    %v1134 = vmul.f32 %v1102, 0.2
    %v1135 = vmul.f32 %v1103, 0.2
    %v1136 = vmul.f32 %v1104, 0.2
    %v1137 = vmul.f32 %v1105, 0.2
    %v1138 = vmul.f32 %v1106, 0.2
    %v1139 = vmul.f32 %v1107, 0.2
    %v1140 = vmul.f32 %v1108, 0.2
    %v1141 = vmul.f32 %v1109, 0.2
    %v1142 = vmul.f32 %v1110, 0.2
    %v1143 = vsel %vm1111, %v1095, %v1127
    %v1144 = vsel %vm1112, %v1096, %v1128
    %v1145 = vsel %vm1113, %v1097, %v1129
    %v1146 = vsel %vm1114, %v1098, %v1130
    %v1147 = vsel %vm1115, %v1099, %v1131
    %v1148 = vsel %vm1116, %v1100, %v1132
    %v1149 = vsel %vm1117, %v1101, %v1133
    %v1150 = vsel %vm1118, %v1102, %v1134
    %v1151 = vsel %vm1119, %v1103, %v1135
    %v1152 = vsel %vm1120, %v1104, %v1136
    %v1153 = vsel %vm1121, %v1105, %v1137
    %v1154 = vsel %vm1122, %v1106, %v1138
    %v1155 = vsel %vm1123, %v1107, %v1139
    %v1156 = vsel %vm1124, %v1108, %v1140
    %v1157 = vsel %vm1125, %v1109, %v1141
    %v1158 = vsel %vm1126, %v1110, %v1142
    %v1159 = vadd.f32 %v1143, %v420
    %v1160 = vadd.f32 %v1144, %v421
    %v1161 = vadd.f32 %v1145, %v422
    %v1162 = vadd.f32 %v1146, %v423
    %v1163 = vadd.f32 %v1147, %v424
    %v1164 = vadd.f32 %v1148, %v425
    %v1165 = vadd.f32 %v1149, %v426
    %v1166 = vadd.f32 %v1150, %v427
    %v1167 = vadd.f32 %v1151, %v428
    %v1168 = vadd.f32 %v1152, %v429
    %v1169 = vadd.f32 %v1153, %v430
    %v1170 = vadd.f32 %v1154, %v431
    %v1171 = vadd.f32 %v1155, %v432
    %v1172 = vadd.f32 %v1156, %v433
    %v1173 = vadd.f32 %v1157, %v434
    %v1174 = vadd.f32 %v1158, %v435
    %1175 = vmax.xlane.f32.xlu0 %v1159
    %v1176 = vpop.xlane.xlu0 %1175
    %1177 = vmax.xlane.f32.xlu0 %v1160
    %v1178 = vpop.xlane.xlu0 %1177
    %1179 = vmax.xlane.f32.xlu0 %v1161
    %v1180 = vpop.xlane.xlu0 %1179
    %1181 = vmax.xlane.f32.xlu0 %v1162
    %v1182 = vpop.xlane.xlu0 %1181
    %1183 = vmax.xlane.f32.xlu0 %v1163
    %v1184 = vpop.xlane.xlu0 %1183
    %1185 = vmax.xlane.f32.xlu0 %v1164
    %v1186 = vpop.xlane.xlu0 %1185
    %1187 = vmax.xlane.f32.xlu0 %v1165
    %v1188 = vpop.xlane.xlu0 %1187
    %1189 = vmax.xlane.f32.xlu0 %v1166
    %v1190 = vpop.xlane.xlu0 %1189
    %1191 = vmax.xlane.f32.xlu0 %v1167
    %v1192 = vpop.xlane.xlu0 %1191
    %1193 = vmax.xlane.f32.xlu0 %v1168
    %v1194 = vpop.xlane.xlu0 %1193
    %1195 = vmax.xlane.f32.xlu0 %v1169
    %v1196 = vpop.xlane.xlu0 %1195
    %1197 = vmax.xlane.f32.xlu0 %v1170
    %v1198 = vpop.xlane.xlu0 %1197
    %1199 = vmax.xlane.f32.xlu0 %v1171
    %v1200 = vpop.xlane.xlu0 %1199
    %1201 = vmax.xlane.f32.xlu0 %v1172
    %v1202 = vpop.xlane.xlu0 %1201
    %1203 = vmax.xlane.f32.xlu0 %v1173
    %v1204 = vpop.xlane.xlu0 %1203
    %1205 = vmax.xlane.f32.xlu0 %v1174
    %v1206 = vpop.xlane.xlu0 %1205
    %v1207 = vsub.f32 %v1159, %v1176
    %v1208 = vsub.f32 %v1160, %v1178
    %v1209 = vsub.f32 %v1161, %v1180
    %v1210 = vsub.f32 %v1162, %v1182
    %v1211 = vsub.f32 %v1163, %v1184
    %v1212 = vsub.f32 %v1164, %v1186
    %v1213 = vsub.f32 %v1165, %v1188
    %v1214 = vsub.f32 %v1166, %v1190
    %v1215 = vsub.f32 %v1167, %v1192
    %v1216 = vsub.f32 %v1168, %v1194
    %v1217 = vsub.f32 %v1169, %v1196
    %v1218 = vsub.f32 %v1170, %v1198
    %v1219 = vsub.f32 %v1171, %v1200
    %v1220 = vsub.f32 %v1172, %v1202
    %v1221 = vsub.f32 %v1173, %v1204
    %v1222 = vsub.f32 %v1174, %v1206
    %v1223 = vmul.f32 %v1207, 1.442695
    %v1224 = vpow.pop %v1223
    %v1225 = vmul.f32 %v1208, 1.442695
    %v1226 = vpow.pop %v1225
    %v1227 = vmul.f32 %v1209, 1.442695
    %v1228 = vpow.pop %v1227
    %v1229 = vmul.f32 %v1210, 1.442695
    %v1230 = vpow.pop %v1229
    %v1231 = vmul.f32 %v1211, 1.442695
    %v1232 = vpow.pop %v1231
    %v1233 = vmul.f32 %v1212, 1.442695
    %v1234 = vpow.pop %v1233
    %v1235 = vmul.f32 %v1213, 1.442695
    %v1236 = vpow.pop %v1235
    %v1237 = vmul.f32 %v1214, 1.442695
    %v1238 = vpow.pop %v1237
    %v1239 = vmul.f32 %v1215, 1.442695
    %v1240 = vpow.pop %v1239
    %v1241 = vmul.f32 %v1216, 1.442695
    %v1242 = vpow.pop %v1241
    %v1243 = vmul.f32 %v1217, 1.442695
    %v1244 = vpow.pop %v1243
    %v1245 = vmul.f32 %v1218, 1.442695
    %v1246 = vpow.pop %v1245
    %v1247 = vmul.f32 %v1219, 1.442695
    %v1248 = vpow.pop %v1247
    %v1249 = vmul.f32 %v1220, 1.442695
    %v1250 = vpow.pop %v1249
    %v1251 = vmul.f32 %v1221, 1.442695
    %v1252 = vpow.pop %v1251
    %v1253 = vmul.f32 %v1222, 1.442695
    %v1254 = vpow.pop %v1253
    %1255 = vadd.xlane.f32.xlu0 %v1224
    %v1256 = vpop.xlane.xlu0 %1255
    %1257 = vadd.xlane.f32.xlu0 %v1226
    %v1258 = vpop.xlane.xlu0 %1257
    %1259 = vadd.xlane.f32.xlu0 %v1228
    %v1260 = vpop.xlane.xlu0 %1259
    %1261 = vadd.xlane.f32.xlu0 %v1230
    %v1262 = vpop.xlane.xlu0 %1261
    %1263 = vadd.xlane.f32.xlu0 %v1232
    %v1264 = vpop.xlane.xlu0 %1263
    %1265 = vadd.xlane.f32.xlu0 %v1234
    %v1266 = vpop.xlane.xlu0 %1265
    %1267 = vadd.xlane.f32.xlu0 %v1236
    %v1268 = vpop.xlane.xlu0 %1267
    %1269 = vadd.xlane.f32.xlu0 %v1238
    %v1270 = vpop.xlane.xlu0 %1269
    %1271 = vadd.xlane.f32.xlu0 %v1240
    %v1272 = vpop.xlane.xlu0 %1271
    %1273 = vadd.xlane.f32.xlu0 %v1242
    %v1274 = vpop.xlane.xlu0 %1273
    %1275 = vadd.xlane.f32.xlu0 %v1244
    %v1276 = vpop.xlane.xlu0 %1275
    %1277 = vadd.xlane.f32.xlu0 %v1246
    %v1278 = vpop.xlane.xlu0 %1277
    %1279 = vadd.xlane.f32.xlu0 %v1248
    %v1280 = vpop.xlane.xlu0 %1279
    %1281 = vadd.xlane.f32.xlu0 %v1250
    %v1282 = vpop.xlane.xlu0 %1281
    %1283 = vadd.xlane.f32.xlu0 %v1252
    %v1284 = vpop.xlane.xlu0 %1283
    %1285 = vadd.xlane.f32.xlu0 %v1254
    %v1286 = vpop.xlane.xlu0 %1285
    %v1287 = vrcp.pop %v1256
    %v1288 = vrcp.pop %v1258
    %v1289 = vrcp.pop %v1260
    %v1290 = vrcp.pop %v1262
    %v1291 = vrcp.pop %v1264
    %v1292 = vrcp.pop %v1266
    %v1293 = vrcp.pop %v1268
    %v1294 = vrcp.pop %v1270
    %v1295 = vrcp.pop %v1272
    %v1296 = vrcp.pop %v1274
    %v1297 = vrcp.pop %v1276
    %v1298 = vrcp.pop %v1278
    %v1299 = vrcp.pop %v1280
    %v1300 = vrcp.pop %v1282
    %v1301 = vrcp.pop %v1284
    %v1302 = vrcp.pop %v1286
    %v1303 = vmul.f32 %v1224, %v1287
    %v1304 = vmul.f32 %v1226, %v1288
    %v1305 = vmul.f32 %v1228, %v1289
    %v1306 = vmul.f32 %v1230, %v1290
    %v1307 = vmul.f32 %v1232, %v1291
    %v1308 = vmul.f32 %v1234, %v1292
    %v1309 = vmul.f32 %v1236, %v1293
    %v1310 = vmul.f32 %v1238, %v1294
    %v1311 = vmul.f32 %v1240, %v1295
    %v1312 = vmul.f32 %v1242, %v1296
    %v1313 = vmul.f32 %v1244, %v1297
    %v1314 = vmul.f32 %v1246, %v1298
    %v1315 = vmul.f32 %v1248, %v1299
    %v1316 = vmul.f32 %v1250, %v1300
    %v1317 = vmul.f32 %v1252, %v1301
    %v1318 = vmul.f32 %v1254, %v1302
    %1319 = vmatpush.msra.mxu0 %v238
    %1320 = vmatpush.msra.mxu0 %v235
    %1321 = vmatpush.msra.mxu0 %v232
    %1322 = vmatpush.msra.mxu0 %v229
    %1323 = vmatpush.msra.mxu0 %v226
    %1324 = vmatpush.msra.mxu0 %v223
    %1325 = vmatpush.msra.mxu0 %v220
    %1326 = vmatpush.msra.mxu0 %v217
    %1327 = vmatpush.msra.mxu0 %v214
    %1328 = vmatpush.msra.mxu0 %v211
    %1329 = vmatpush.msra.mxu0 %v208
    %1330 = vmatpush.msra.mxu0 %v205
    %1331 = vmatpush.msra.mxu0 %v202
    %1332 = vmatpush.msra.mxu0 %v199
    %1333 = vmatpush.msra.mxu0 %v196
    %1334 = vmatpush.msra.mxu0 %v193
    %1335 = vmatmul.f32.gmra.mxu0 %v1303
    %v1336 = vpop.f32.mrf.mxu0
    %v1337 = vadd.f32 0.0, %v1336
    %1338 = vmatmul.f32.gmra.mxu0 %v1304
    %v1339 = vpop.f32.mrf.mxu0
    %v1340 = vadd.f32 0.0, %v1339
    %1341 = vmatmul.f32.gmra.mxu0 %v1305
    %v1342 = vpop.f32.mrf.mxu0
    %v1343 = vadd.f32 0.0, %v1342
    %1344 = vmatmul.f32.gmra.mxu0 %v1306
    %v1345 = vpop.f32.mrf.mxu0
    %v1346 = vadd.f32 0.0, %v1345
    %1347 = vmatmul.f32.gmra.mxu0 %v1307
    %v1348 = vpop.f32.mrf.mxu0
    %v1349 = vadd.f32 0.0, %v1348
    %1350 = vmatmul.f32.gmra.mxu0 %v1308
    %v1351 = vpop.f32.mrf.mxu0
    %v1352 = vadd.f32 0.0, %v1351
    %1353 = vmatmul.f32.gmra.mxu0 %v1309
    %v1354 = vpop.f32.mrf.mxu0
    %v1355 = vadd.f32 0.0, %v1354
    %1356 = vmatmul.f32.gmra.mxu0 %v1310
    %v1357 = vpop.f32.mrf.mxu0
    %v1358 = vadd.f32 0.0, %v1357
    %1359 = vmatmul.f32.gmra.mxu0 %v1311
    %v1360 = vpop.f32.mrf.mxu0
    %v1361 = vadd.f32 0.0, %v1360
    %1362 = vmatmul.f32.gmra.mxu0 %v1312
    %v1363 = vpop.f32.mrf.mxu0
    %v1364 = vadd.f32 0.0, %v1363
    %1365 = vmatmul.f32.gmra.mxu0 %v1313
    %v1366 = vpop.f32.mrf.mxu0
    %v1367 = vadd.f32 0.0, %v1366
    %1368 = vmatmul.f32.gmra.mxu0 %v1314
    %v1369 = vpop.f32.mrf.mxu0
    %v1370 = vadd.f32 0.0, %v1369
    %1371 = vmatmul.f32.gmra.mxu0 %v1315
    %v1372 = vpop.f32.mrf.mxu0
    %v1373 = vadd.f32 0.0, %v1372
    %1374 = vmatmul.f32.gmra.mxu0 %v1316
    %v1375 = vpop.f32.mrf.mxu0
    %v1376 = vadd.f32 0.0, %v1375
    %1377 = vmatmul.f32.gmra.mxu0 %v1317
    %v1378 = vpop.f32.mrf.mxu0
    %v1379 = vadd.f32 0.0, %v1378
    %1380 = vmatmul.f32.gmra.mxu0 %v1318
    %v1381 = vpop.f32.mrf.mxu0
    %v1382 = vadd.f32 0.0, %v1381
    %1383 = vdwg.mxu0
    %v1384 = vld [vmem:[%s5] sm:$0x3]
    %v1386 = vperm.slane %v1384, 0
    %v1387 = vperm.slane %v1384, 1
    %v1390 = vadd.f32 %v898, %v1386
    %v1391 = vadd.f32 %v1337, %v1387
    %v1392 = vadd.f32 %v901, %v1386
    %v1393 = vadd.f32 %v1340, %v1387
    %v1394 = vadd.f32 %v904, %v1386
    %v1395 = vadd.f32 %v1343, %v1387
    %v1396 = vadd.f32 %v907, %v1386
    %v1397 = vadd.f32 %v1346, %v1387
    %v1398 = vadd.f32 %v910, %v1386
    %v1399 = vadd.f32 %v1349, %v1387
    %v1400 = vadd.f32 %v913, %v1386
    %v1401 = vadd.f32 %v1352, %v1387
    %v1402 = vadd.f32 %v916, %v1386
    %v1403 = vadd.f32 %v1355, %v1387
    %v1404 = vadd.f32 %v919, %v1386
    %v1405 = vadd.f32 %v1358, %v1387
    %v1406 = vadd.f32 %v922, %v1386
    %v1407 = vadd.f32 %v1361, %v1387
    %v1408 = vadd.f32 %v925, %v1386
    %v1409 = vadd.f32 %v1364, %v1387
    %v1410 = vadd.f32 %v928, %v1386
    %v1411 = vadd.f32 %v1367, %v1387
    %v1412 = vadd.f32 %v931, %v1386
    %v1413 = vadd.f32 %v1370, %v1387
    %v1414 = vadd.f32 %v934, %v1386
    %v1415 = vadd.f32 %v1373, %v1387
    %v1416 = vadd.f32 %v937, %v1386
    %v1417 = vadd.f32 %v1376, %v1387
    %v1418 = vadd.f32 %v940, %v1386
    %v1419 = vadd.f32 %v1379, %v1387
    %v1420 = vadd.f32 %v943, %v1386
    %v1421 = vadd.f32 %v1382, %v1387
    %vm1422 = vcmp.gt.f32.partialorder %v1390, 0.0
    %vm1423 = vcmp.gt.f32.partialorder %v1391, 0.0
    %vm1424 = vcmp.gt.f32.partialorder %v1392, 0.0
    %vm1425 = vcmp.gt.f32.partialorder %v1393, 0.0
    %vm1426 = vcmp.gt.f32.partialorder %v1394, 0.0
    %vm1427 = vcmp.gt.f32.partialorder %v1395, 0.0
    %vm1428 = vcmp.gt.f32.partialorder %v1396, 0.0
    %vm1429 = vcmp.gt.f32.partialorder %v1397, 0.0
    %vm1430 = vcmp.gt.f32.partialorder %v1398, 0.0
    %vm1431 = vcmp.gt.f32.partialorder %v1399, 0.0
    %vm1432 = vcmp.gt.f32.partialorder %v1400, 0.0
    %vm1433 = vcmp.gt.f32.partialorder %v1401, 0.0
    %vm1434 = vcmp.gt.f32.partialorder %v1402, 0.0
    %vm1435 = vcmp.gt.f32.partialorder %v1403, 0.0
    %vm1436 = vcmp.gt.f32.partialorder %v1404, 0.0
    %vm1437 = vcmp.gt.f32.partialorder %v1405, 0.0
    %vm1438 = vcmp.gt.f32.partialorder %v1406, 0.0
    %vm1439 = vcmp.gt.f32.partialorder %v1407, 0.0
    %vm1440 = vcmp.gt.f32.partialorder %v1408, 0.0
    %vm1441 = vcmp.gt.f32.partialorder %v1409, 0.0
    %vm1442 = vcmp.gt.f32.partialorder %v1410, 0.0
    %vm1443 = vcmp.gt.f32.partialorder %v1411, 0.0
    %vm1444 = vcmp.gt.f32.partialorder %v1412, 0.0
    %vm1445 = vcmp.gt.f32.partialorder %v1413, 0.0
    %vm1446 = vcmp.gt.f32.partialorder %v1414, 0.0
    %vm1447 = vcmp.gt.f32.partialorder %v1415, 0.0
    %vm1448 = vcmp.gt.f32.partialorder %v1416, 0.0
    %vm1449 = vcmp.gt.f32.partialorder %v1417, 0.0
    %vm1450 = vcmp.gt.f32.partialorder %v1418, 0.0
    %vm1451 = vcmp.gt.f32.partialorder %v1419, 0.0
    %vm1452 = vcmp.gt.f32.partialorder %v1420, 0.0
    %vm1453 = vcmp.gt.f32.partialorder %v1421, 0.0
    %v1454 = vmul.f32 %v1390, 1.442695
    %v1455 = vpow.pop %v1454
    %v1456 = vmul.f32 %v1391, 1.442695
    %v1457 = vpow.pop %v1456
    %v1458 = vmul.f32 %v1392, 1.442695
    %v1459 = vpow.pop %v1458
    %v1460 = vmul.f32 %v1393, 1.442695
    %v1461 = vpow.pop %v1460
    %v1462 = vmul.f32 %v1394, 1.442695
    %v1463 = vpow.pop %v1462
    %v1464 = vmul.f32 %v1395, 1.442695
    %v1465 = vpow.pop %v1464
    %v1466 = vmul.f32 %v1396, 1.442695
    %v1467 = vpow.pop %v1466
    %v1468 = vmul.f32 %v1397, 1.442695
    %v1469 = vpow.pop %v1468
    %v1470 = vmul.f32 %v1398, 1.442695
    %v1471 = vpow.pop %v1470
    %v1472 = vmul.f32 %v1399, 1.442695
    %v1473 = vpow.pop %v1472
    %v1474 = vmul.f32 %v1400, 1.442695
    %v1475 = vpow.pop %v1474
    %v1476 = vmul.f32 %v1401, 1.442695
    %v1477 = vpow.pop %v1476
    %v1478 = vmul.f32 %v1402, 1.442695
    %v1479 = vpow.pop %v1478
    %v1480 = vmul.f32 %v1403, 1.442695
    %v1481 = vpow.pop %v1480
    %v1482 = vmul.f32 %v1404, 1.442695
    %v1483 = vpow.pop %v1482
    %v1484 = vmul.f32 %v1405, 1.442695
    %v1485 = vpow.pop %v1484
    %v1486 = vmul.f32 %v1406, 1.442695
    %v1487 = vpow.pop %v1486
    %v1488 = vmul.f32 %v1407, 1.442695
    %v1489 = vpow.pop %v1488
    %v1490 = vmul.f32 %v1408, 1.442695
    %v1491 = vpow.pop %v1490
    %v1492 = vmul.f32 %v1409, 1.442695
    %v1493 = vpow.pop %v1492
    %v1494 = vmul.f32 %v1410, 1.442695
    %v1495 = vpow.pop %v1494
    %v1496 = vmul.f32 %v1411, 1.442695
    %v1497 = vpow.pop %v1496
    %v1498 = vmul.f32 %v1412, 1.442695
    %v1499 = vpow.pop %v1498
    %v1500 = vmul.f32 %v1413, 1.442695
    %v1501 = vpow.pop %v1500
    %v1502 = vmul.f32 %v1414, 1.442695
    %v1503 = vpow.pop %v1502
    %v1504 = vmul.f32 %v1415, 1.442695
    %v1505 = vpow.pop %v1504
    %v1506 = vmul.f32 %v1416, 1.442695
    %v1507 = vpow.pop %v1506
    %v1508 = vmul.f32 %v1417, 1.442695
    %v1509 = vpow.pop %v1508
    %v1510 = vmul.f32 %v1418, 1.442695
    %v1511 = vpow.pop %v1510
    %v1512 = vmul.f32 %v1419, 1.442695
    %v1513 = vpow.pop %v1512
    %v1514 = vmul.f32 %v1420, 1.442695
    %v1515 = vpow.pop %v1514
    %v1516 = vmul.f32 %v1421, 1.442695
    %v1517 = vpow.pop %v1516
    %v1518 = vsub.f32 %v1455, 1.0
    %v1519 = vsub.f32 %v1457, 1.0
    %v1520 = vsub.f32 %v1459, 1.0
    %v1521 = vsub.f32 %v1461, 1.0
    %v1522 = vsub.f32 %v1463, 1.0
    %v1523 = vsub.f32 %v1465, 1.0
    %v1524 = vsub.f32 %v1467, 1.0
    %v1525 = vsub.f32 %v1469, 1.0
    %v1526 = vsub.f32 %v1471, 1.0
    %v1527 = vsub.f32 %v1473, 1.0
    %v1528 = vsub.f32 %v1475, 1.0
    %v1529 = vsub.f32 %v1477, 1.0
    %v1530 = vsub.f32 %v1479, 1.0
    %v1531 = vsub.f32 %v1481, 1.0
    %v1532 = vsub.f32 %v1483, 1.0
    %v1533 = vsub.f32 %v1485, 1.0
    %v1534 = vsub.f32 %v1487, 1.0
    %v1535 = vsub.f32 %v1489, 1.0
    %v1536 = vsub.f32 %v1491, 1.0
    %v1537 = vsub.f32 %v1493, 1.0
    %v1538 = vsub.f32 %v1495, 1.0
    %v1539 = vsub.f32 %v1497, 1.0
    %v1540 = vsub.f32 %v1499, 1.0
    %v1541 = vsub.f32 %v1501, 1.0
    %v1542 = vsub.f32 %v1503, 1.0
    %v1543 = vsub.f32 %v1505, 1.0
    %v1544 = vsub.f32 %v1507, 1.0
    %v1545 = vsub.f32 %v1509, 1.0
    %v1546 = vsub.f32 %v1511, 1.0
    %v1547 = vsub.f32 %v1513, 1.0
    %v1548 = vsub.f32 %v1515, 1.0
    %v1549 = vsub.f32 %v1517, 1.0
    %v1550 = vsel %vm1422, %v1390, %v1518
    %v1551 = vsel %vm1423, %v1391, %v1519
    %v1552 = vsel %vm1424, %v1392, %v1520
    %v1553 = vsel %vm1425, %v1393, %v1521
    %v1554 = vsel %vm1426, %v1394, %v1522
    %v1555 = vsel %vm1427, %v1395, %v1523
    %v1556 = vsel %vm1428, %v1396, %v1524
    %v1557 = vsel %vm1429, %v1397, %v1525
    %v1558 = vsel %vm1430, %v1398, %v1526
    %v1559 = vsel %vm1431, %v1399, %v1527
    %v1560 = vsel %vm1432, %v1400, %v1528
    %v1561 = vsel %vm1433, %v1401, %v1529
    %v1562 = vsel %vm1434, %v1402, %v1530
    %v1563 = vsel %vm1435, %v1403, %v1531
    %v1564 = vsel %vm1436, %v1404, %v1532
    %v1565 = vsel %vm1437, %v1405, %v1533
    %v1566 = vsel %vm1438, %v1406, %v1534
    %v1567 = vsel %vm1439, %v1407, %v1535
    %v1568 = vsel %vm1440, %v1408, %v1536
    %v1569 = vsel %vm1441, %v1409, %v1537
    %v1570 = vsel %vm1442, %v1410, %v1538
    %v1571 = vsel %vm1443, %v1411, %v1539
    %v1572 = vsel %vm1444, %v1412, %v1540
    %v1573 = vsel %vm1445, %v1413, %v1541
    %v1574 = vsel %vm1446, %v1414, %v1542
    %v1575 = vsel %vm1447, %v1415, %v1543
    %v1576 = vsel %vm1448, %v1416, %v1544
    %v1577 = vsel %vm1449, %v1417, %v1545
    %v1578 = vsel %vm1450, %v1418, %v1546
    %v1579 = vsel %vm1451, %v1419, %v1547
    %v1580 = vsel %vm1452, %v1420, %v1548
    %v1581 = vsel %vm1453, %v1421, %v1549
    %1582 = vst [vmem:[#allocation2] sm:$0xff] %v1550
    %1583 = vst [vmem:[#allocation2 + $0x8] sm:$0xff] %v1551
    %1584 = vst [vmem:[#allocation2 + $0x10] sm:$0xff] %v1552
    %1585 = vst [vmem:[#allocation2 + $0x18] sm:$0xff] %v1553
    %1586 = vst [vmem:[#allocation2 + $0x20] sm:$0xff] %v1554
    %1587 = vst [vmem:[#allocation2 + $0x28] sm:$0xff] %v1555
    %1588 = vst [vmem:[#allocation2 + $0x30] sm:$0xff] %v1556
    %1589 = vst [vmem:[#allocation2 + $0x38] sm:$0xff] %v1557
    %1590 = vst [vmem:[#allocation2 + $0x40] sm:$0xff] %v1558
    %1591 = vst [vmem:[#allocation2 + $0x48] sm:$0xff] %v1559
    %1592 = vst [vmem:[#allocation2 + $0x50] sm:$0xff] %v1560
    %1593 = vst [vmem:[#allocation2 + $0x58] sm:$0xff] %v1561
    %1594 = vst [vmem:[#allocation2 + $0x60] sm:$0xff] %v1562
    %1595 = vst [vmem:[#allocation2 + $0x68] sm:$0xff] %v1563
    %1596 = vst [vmem:[#allocation2 + $0x70] sm:$0xff] %v1564
    %1597 = vst [vmem:[#allocation2 + $0x78] sm:$0xff] %v1565
    %1598 = vst [vmem:[#allocation2 + $0x80] sm:$0xff] %v1566
    %1599 = vst [vmem:[#allocation2 + $0x88] sm:$0xff] %v1567
    %1600 = vst [vmem:[#allocation2 + $0x90] sm:$0xff] %v1568
    %1601 = vst [vmem:[#allocation2 + $0x98] sm:$0xff] %v1569
    %1602 = vst [vmem:[#allocation2 + $0xa0] sm:$0xff] %v1570
    %1603 = vst [vmem:[#allocation2 + $0xa8] sm:$0xff] %v1571
    %1604 = vst [vmem:[#allocation2 + $0xb0] sm:$0xff] %v1572
    %1605 = vst [vmem:[#allocation2 + $0xb8] sm:$0xff] %v1573
    %1606 = vst [vmem:[#allocation2 + $0xc0] sm:$0xff] %v1574
    %1607 = vst [vmem:[#allocation2 + $0xc8] sm:$0xff] %v1575
    %1608 = vst [vmem:[#allocation2 + $0xd0] sm:$0xff] %v1576
    %1609 = vst [vmem:[#allocation2 + $0xd8] sm:$0xff] %v1577
    %1610 = vst [vmem:[#allocation2 + $0xe0] sm:$0xff] %v1578
    %1611 = vst [vmem:[#allocation2 + $0xe8] sm:$0xff] %v1579
    %1612 = vst [vmem:[#allocation2 + $0xf0] sm:$0xff] %v1580
    %1613 = vst [vmem:[#allocation2 + $0xf8] sm:$0xff] %v1581
    // Predicated region
    $region30: #{tpu_custom_call.1} parent=1 // pred_check
      _
    $region31: #{tpu_custom_call.1} parent=1 // pred_check_branch
      %1615 = sbr.rel (0) target = $region33
    $region32: #{tpu_custom_call.1} parent=1 // pred_region
      %1617 = vsyncadd [#allocation3], 0
      %s1618 = sshll.u32 [#allocation2], 4
      %s1619 = int_to_ptr.vmem [resolvable:$true] %s1618
      %s1620 = sshll.u32 %s7, 4
      %s1621 = int_to_ptr.hbm [resolvable:$true] %s1620
      %1626 = dma.vmem_to_hbm [thread:$0]  %s1619, 4096, %s1621, [#allocation3], 256, 256, 16
    $region33: #{tpu_custom_call.1} parent=1 // pred_fallthru
      _
    // Predicated region
    $region34: #{tpu_custom_call.1} parent=1 // pred_check
      _
    $region35: #{tpu_custom_call.1} parent=1 // pred_check_branch
      %1628 = sbr.rel (0) target = $region37
    $region36: #{tpu_custom_call.1} parent=1 // pred_region
      %1630 = dma.done [#allocation3], 4096
    $region37: #{tpu_custom_call.1} parent=1 // pred_fallthru
      _
    %1631 = vsyncpa [#allocation3], 1

</llo_original>
